<compile_context>
chip_gen: v6e
topology: v6e:2x2x1
jax: 0.10.0
libtpu: 0.0.40
codegen_flags: <defaults>
</compile_context>

<pallas_src>
import jax
import jax.numpy as jnp
from jax.experimental import pallas as pl
from jax.experimental.pallas import tpu as pltpu

MAX_SENTENCE = 12     # LSTM batch dim, and in_features of the final fc
NUM_CLASSES = 2


# ----------------------------------------------------------------------------
# Fused kernel: BiLSTM recurrence (both directions) + mean-over-hidden + fc head
# ----------------------------------------------------------------------------
def _brnn_fused_kernel(x_ref, wif_ref, wib_ref, whh_ref, b_ref, wfc_ref, bfc_ref,
                       y_ref, gmix_sc):
    T, S, _ = x_ref.shape
    H = whh_ref.shape[0] // 2          # packed gate width is 8H, hidden state is 2H

    wif = wif_ref[...]                 # (I, 8H) bf16, fwd weights in fwd cols, 0 elsewhere
    wib = wib_ref[...]                 # (I, 8H) bf16, bwd weights in bwd cols, 0 elsewhere
    whh = whh_ref[...]                 # (2H, 8H) bf16, block-diagonal recurrent weights
    bias = b_ref[...]                  # (1, 8H) f32

    # ---- Hoisted input projections (independent of h -> off the serial chain) ----
    # gmix_sc[t] is a step-aligned (S, 8H) slab: fwd gate columns come from x[t],
    # bwd gate columns come from x[T-1-t].
    for t in range(T):
        xa = x_ref[t].astype(jnp.bfloat16)           # (S, I)
        xb = x_ref[T - 1 - t].astype(jnp.bfloat16)   # (S, I)
        gmix_sc[t] = (jnp.dot(xa, wif, preferred_element_type=jnp.float32)
                      + jnp.dot(xb, wib, preferred_element_type=jnp.float32)
                      + bias)

    # ---- Serial recurrence: fully unrolled (T is tiny & static) ----
    h_cat = jnp.zeros((S, 2 * H), jnp.float32)       # (h_f | h_b)
    c_cat = jnp.zeros((S, 2 * H), jnp.float32)       # (c_f | c_b)
    doc_f = [None] * T
    doc_b = [None] * T

    for t in range(T):
        # One block-diagonal MXU issue per step for BOTH directions.
        hmat = jnp.dot(h_cat.astype(jnp.bfloat16), whh,
                       preferred_element_type=jnp.float32)        # (S, 8H)
        gates = gmix_sc[t] + hmat
        # Lane-dense activations: one sigmoid over the contiguous i|f|o block (6H lanes),
        # one tanh over the g block (2H lanes).  f32 elementwise (v5e-safe).
        sig = jax.nn.sigmoid(gates[:, :6 * H])
        g_cat = jnp.tanh(gates[:, 6 * H:])
        i_cat = sig[:, 0:2 * H]
        f_cat = sig[:, 2 * H:4 * H]
        o_cat = sig[:, 4 * H:6 * H]
        c_cat = f_cat * c_cat + i_cat * g_cat
        h_cat = o_cat * jnp.tanh(c_cat)
        # Per-step lane reductions for the mean head (off the recurrence chain).
        doc_f[t] = jnp.sum(h_cat[:, :H], axis=-1, keepdims=True)          # (S, 1)
        doc_b[T - 1 - t] = jnp.sum(h_cat[:, H:], axis=-1, keepdims=True)  # (S, 1)

    # ---- mean over 2H + fc head, all tiny 2-D ops, no scratch ----
    wfc = wfc_ref[...]                               # (S, C) f32
    scale = 1.0 / (2.0 * H)
    y_rows = []
    for t in range(T):
        doc_col = (doc_f[t] + doc_b[t]) * scale                          # (S, 1)
        y_rows.append(jnp.sum(doc_col * wfc, axis=0, keepdims=True))     # (1, C)
    y_ref[...] = jnp.concatenate(y_rows, axis=0) + bfc_ref[...]          # (T, C)


@jax.jit
def brnn_forward(x, packed):
    """x: (T, S, I) f32; packed: pre-packed bf16/f32 params from pack_params()."""
    T, S, _ = x.shape
    H = packed["w_hh"].shape[0] // 2
    C = packed["w_fc"].shape[1]

    vmem = pl.BlockSpec(memory_space=pltpu.MemorySpace.VMEM)
    return pl.pallas_call(
        _brnn_fused_kernel,
        out_shape=jax.ShapeDtypeStruct((T, C), jnp.float32),
        in_specs=[vmem] * 7,
        out_specs=vmem,
        scratch_shapes=[pltpu.VMEM((T, S, 8 * H), jnp.float32)],   # step-aligned gate slabs
    )(x, packed["w_ih_f"], packed["w_ih_b"], packed["w_hh"],
      packed["b"], packed["w_fc"], packed["b_fc"])


# ----------------------------------------------------------------------------
# One-time parameter packing (runs at init, NOT on the per-call path)
# ----------------------------------------------------------------------------
def _place_dir(w4, direction):
    """Scatter a (..., 4H) tensor in PyTorch gate order [i, f, g, o] into the packed
    8H column layout [i_f|i_b | f_f|f_b | o_f|o_b | g_f|g_b] for one direction."""
    i, f, g, o = jnp.split(w4, 4, axis=-1)
    z = jnp.zeros_like(i)
    if direction == 0:     # forward -> even slots
        parts = [i, z, f, z, o, z, g, z]
    else:                  # backward -> odd slots
        parts = [z, i, z, f, z, o, z, g]
    return jnp.concatenate(parts, axis=-1)


def pack_params(p):
    w_ih_f = _place_dir(p["w_ih_f_t"], 0).astype(jnp.bfloat16)     # (I, 8H)
    w_ih_b = _place_dir(p["w_ih_b_t"], 1).astype(jnp.bfloat16)     # (I, 8H)
    bias = (_place_dir(p["b_f"], 0) + _place_dir(p["b_b"], 1)).astype(jnp.float32)  # (1, 8H)
    # Block-diagonal recurrent weights: rows [0:H] act on h_f, rows [H:2H] on h_b.
    w_hh = jnp.concatenate([_place_dir(p["w_hh_f_t"], 0),
                            _place_dir(p["w_hh_b_t"], 1)], axis=0).astype(jnp.bfloat16)
    return {"w_ih_f": w_ih_f, "w_ih_b": w_ih_b, "b": bias, "w_hh": w_hh,
            "w_fc": p["w_fc_t"].astype(jnp.float32),
            "b_fc": p["b_fc"].astype(jnp.float32)}


# ----------------------------------------------------------------------------
# Pure-JAX reference (same bf16 matmul operands, f32 accumulation/elementwise)
# ----------------------------------------------------------------------------
def _lstm_ref(x, w_ih_t, w_hh_t, b2d):
    H = w_hh_t.shape[0]
    S = x.shape[1]
    w_ih_bf = w_ih_t.astype(jnp.bfloat16)
    w_hh_bf = w_hh_t.astype(jnp.bfloat16)

    def step(carry, x_t):
        h, c = carry
        gates = (jnp.dot(x_t, w_ih_bf, preferred_element_type=jnp.float32)
                 + jnp.dot(h.astype(jnp.bfloat16), w_hh_bf,
                           preferred_element_type=jnp.float32)
                 + b2d)
        i = jax.nn.sigmoid(gates[:, :H])
        f = jax.nn.sigmoid(gates[:, H:2 * H])
        g = jnp.tanh(gates[:, 2 * H:3 * H])
        o = jax.nn.sigmoid(gates[:, 3 * H:])
        c = f * c + i * g
        h = o * jnp.tanh(c)
        return (h, c), h

    init = (jnp.zeros((S, H), jnp.float32), jnp.zeros((S, H), jnp.float32))
    _, hs = jax.lax.scan(step, init, x.astype(jnp.bfloat16))
    return hs


def brnn_forward_ref(x, p):
    fwd = _lstm_ref(x, p["w_ih_f_t"], p["w_hh_f_t"], p["b_f"])
    bwd = _lstm_ref(x[::-1], p["w_ih_b_t"], p["w_hh_b_t"], p["b_b"])[::-1]
    out = jnp.concatenate([fwd, bwd], axis=-1)          # (T, S, 2H)
    doc = jnp.mean(out, axis=-1)                        # (T, S)
    return doc @ p["w_fc_t"] + p["b_fc"]                # (T, C)


# ----------------------------------------------------------------------------
# Deterministic parameter init (shapes follow the module; sizes kept small)
# ----------------------------------------------------------------------------
def init_params(key, input_size, hidden_size, num_classes):
    ks = jax.random.split(key, 10)
    H, I = hidden_size, input_size
    bound = 1.0 / jnp.sqrt(H)

    def u(k, shape):
        return jax.random.uniform(k, shape, jnp.float32, -bound, bound)

    # Stored pre-transposed for right-multiply form; PyTorch gate order (i, f, g, o).
    params = {
        "w_ih_f_t": u(ks[0], (I, 4 * H)),
        "w_hh_f_t": u(ks[1], (H, 4 * H)),
        "b_f":      u(ks[2], (1, 4 * H)) + u(ks[3], (1, 4 * H)),   # b_ih + b_hh
        "w_ih_b_t": u(ks[4], (I, 4 * H)),
        "w_hh_b_t": u(ks[5], (H, 4 * H)),
        "b_b":      u(ks[6], (1, 4 * H)) + u(ks[7], (1, 4 * H)),
        # fc: Linear(MAX_SENTENCE, num_classes)
        "w_fc_t":   jax.random.uniform(ks[8], (MAX_SENTENCE, num_classes),
                                       jnp.float32, -1.0 / jnp.sqrt(MAX_SENTENCE),
                                       1.0 / jnp.sqrt(MAX_SENTENCE)),
        "b_fc":     jax.random.uniform(ks[9], (1, num_classes),
                                       jnp.float32, -1.0 / jnp.sqrt(MAX_SENTENCE),
                                       1.0 / jnp.sqrt(MAX_SENTENCE)),
    }
    return params


if __name__ == "__main__":
    # Small shapes: T=4 documents, S=MAX_SENTENCE=12 sentences (LSTM batch),
    # input features I=64 (stand-in for MAX_WORDS*ENC_VECTOR), hidden H=32.
    T, S, I, H = 4, MAX_SENTENCE, 64, 32

    key = jax.random.PRNGKey(0)
    kx, kp = jax.random.split(key)
    x = jax.random.normal(kx, (T, S, I), jnp.float32)
    raw_params = init_params(kp, I, H, NUM_CLASSES)
    packed_params = pack_params(raw_params)        # one-time packing, off the call path

    y = jax.block_until_ready(brnn_forward(x, packed_params))
    y_ref = brnn_forward_ref(x, raw_params)

    assert y.shape == (T, NUM_CLASSES)
    assert jnp.allclose(y, y_ref, rtol=1e-3, atol=2e-3), (y, y_ref)

    print("KERNEL_OK")
</pallas_src>

<mosaic_0001>
module attributes {stable_mosaic.version = 11 : i64} {
  func.func @_brnn_fused_kernel(%arg0: memref<4x12x64xf32, #tpu.memory_space<vmem>>, %arg1: memref<64x256xbf16, #tpu.memory_space<vmem>>, %arg2: memref<64x256xbf16, #tpu.memory_space<vmem>>, %arg3: memref<64x256xbf16, #tpu.memory_space<vmem>>, %arg4: memref<1x256xf32, #tpu.memory_space<vmem>>, %arg5: memref<12x2xf32, #tpu.memory_space<vmem>>, %arg6: memref<1x2xf32, #tpu.memory_space<vmem>>, %arg7: memref<4x2xf32, #tpu.memory_space<vmem>>, %arg8: memref<4x12x256xf32, #tpu.memory_space<vmem>>) attributes {dimension_semantics = [], scalar_prefetch = 0 : i64, scratch_operands = 1 : i64, tpu.core_type = #tpu.core_type<tc>} {
    %c0 = arith.constant 0 : index
    %c0_0 = arith.constant 0 : index
    %0 = vector.load %arg1[%c0, %c0_0] : memref<64x256xbf16, #tpu.memory_space<vmem>>, vector<64x256xbf16>
    %c0_1 = arith.constant 0 : index
    %c0_2 = arith.constant 0 : index
    %1 = vector.load %arg2[%c0_1, %c0_2] : memref<64x256xbf16, #tpu.memory_space<vmem>>, vector<64x256xbf16>
    %c0_3 = arith.constant 0 : index
    %c0_4 = arith.constant 0 : index
    %2 = vector.load %arg3[%c0_3, %c0_4] : memref<64x256xbf16, #tpu.memory_space<vmem>>, vector<64x256xbf16>
    %c0_5 = arith.constant 0 : index
    %c0_6 = arith.constant 0 : index
    %3 = vector.load %arg4[%c0_5, %c0_6] : memref<1x256xf32, #tpu.memory_space<vmem>>, vector<1x256xf32>
    %c0_7 = arith.constant 0 : index
    %c0_8 = arith.constant 0 : index
    %c0_9 = arith.constant 0 : index
    %4 = vector.load %arg0[%c0_7, %c0_8, %c0_9] : memref<4x12x64xf32, #tpu.memory_space<vmem>>, vector<1x12x64xf32>
    %5 = vector.shape_cast %4 : vector<1x12x64xf32> to vector<12x64xf32>
    %6 = arith.truncf %5 : vector<12x64xf32> to vector<12x64xbf16>
    %c3 = arith.constant 3 : index
    %c0_10 = arith.constant 0 : index
    %c0_11 = arith.constant 0 : index
    %7 = vector.load %arg0[%c3, %c0_10, %c0_11] : memref<4x12x64xf32, #tpu.memory_space<vmem>>, vector<1x12x64xf32>
    %8 = vector.shape_cast %7 : vector<1x12x64xf32> to vector<12x64xf32>
    %9 = arith.truncf %8 : vector<12x64xf32> to vector<12x64xbf16>
    %cst = arith.constant dense<0.000000e+00> : vector<12x256xf32>
    %10 = tpu.matmul %6, %0, %cst {dimension_numbers = #tpu.dot_dimension_numbers<[1], [0], [0], [1], [0, 0, 1, 1], [], []>} : vector<12x64xbf16>, vector<64x256xbf16>, vector<12x256xf32> -> vector<12x256xf32>
    %cst_12 = arith.constant dense<0.000000e+00> : vector<12x256xf32>
    %11 = tpu.matmul %9, %1, %cst_12 {dimension_numbers = #tpu.dot_dimension_numbers<[1], [0], [0], [1], [0, 0, 1, 1], [], []>} : vector<12x64xbf16>, vector<64x256xbf16>, vector<12x256xf32> -> vector<12x256xf32>
    %12 = arith.addf %10, %11 : vector<12x256xf32>
    %13 = vector.broadcast %3 : vector<1x256xf32> to vector<12x256xf32>
    %14 = arith.addf %12, %13 : vector<12x256xf32>
    %c0_13 = arith.constant 0 : index
    %c0_14 = arith.constant 0 : index
    %c0_15 = arith.constant 0 : index
    %15 = vector.load %arg8[%c0_13, %c0_14, %c0_15] : memref<4x12x256xf32, #tpu.memory_space<vmem>>, vector<1x12x256xf32>
    %16 = vector.shape_cast %15 : vector<1x12x256xf32> to vector<12x256xf32>
    %17 = vector.shape_cast %14 : vector<12x256xf32> to vector<1x12x256xf32>
    tpu.vector_store %arg8[%c0_13, %c0_14, %c0_15], %17 {strides = array<i32>} : memref<4x12x256xf32, #tpu.memory_space<vmem>>, vector<1x12x256xf32>,
    %c1 = arith.constant 1 : index
    %c0_16 = arith.constant 0 : index
    %c0_17 = arith.constant 0 : index
    %18 = vector.load %arg0[%c1, %c0_16, %c0_17] : memref<4x12x64xf32, #tpu.memory_space<vmem>>, vector<1x12x64xf32>
    %19 = vector.shape_cast %18 : vector<1x12x64xf32> to vector<12x64xf32>
    %20 = arith.truncf %19 : vector<12x64xf32> to vector<12x64xbf16>
    %c2 = arith.constant 2 : index
    %c0_18 = arith.constant 0 : index
    %c0_19 = arith.constant 0 : index
    %21 = vector.load %arg0[%c2, %c0_18, %c0_19] : memref<4x12x64xf32, #tpu.memory_space<vmem>>, vector<1x12x64xf32>
    %22 = vector.shape_cast %21 : vector<1x12x64xf32> to vector<12x64xf32>
    %23 = arith.truncf %22 : vector<12x64xf32> to vector<12x64xbf16>
    %cst_20 = arith.constant dense<0.000000e+00> : vector<12x256xf32>
    %24 = tpu.matmul %20, %0, %cst_20 {dimension_numbers = #tpu.dot_dimension_numbers<[1], [0], [0], [1], [0, 0, 1, 1], [], []>} : vector<12x64xbf16>, vector<64x256xbf16>, vector<12x256xf32> -> vector<12x256xf32>
    %cst_21 = arith.constant dense<0.000000e+00> : vector<12x256xf32>
    %25 = tpu.matmul %23, %1, %cst_21 {dimension_numbers = #tpu.dot_dimension_numbers<[1], [0], [0], [1], [0, 0, 1, 1], [], []>} : vector<12x64xbf16>, vector<64x256xbf16>, vector<12x256xf32> -> vector<12x256xf32>
    %26 = arith.addf %24, %25 : vector<12x256xf32>
    %27 = vector.broadcast %3 : vector<1x256xf32> to vector<12x256xf32>
    %28 = arith.addf %26, %27 : vector<12x256xf32>
    %c1_22 = arith.constant 1 : index
    %c0_23 = arith.constant 0 : index
    %c0_24 = arith.constant 0 : index
    %29 = vector.load %arg8[%c1_22, %c0_23, %c0_24] : memref<4x12x256xf32, #tpu.memory_space<vmem>>, vector<1x12x256xf32>
    %30 = vector.shape_cast %29 : vector<1x12x256xf32> to vector<12x256xf32>
    %31 = vector.shape_cast %28 : vector<12x256xf32> to vector<1x12x256xf32>
    tpu.vector_store %arg8[%c1_22, %c0_23, %c0_24], %31 {strides = array<i32>} : memref<4x12x256xf32, #tpu.memory_space<vmem>>, vector<1x12x256xf32>,
    %c2_25 = arith.constant 2 : index
    %c0_26 = arith.constant 0 : index
    %c0_27 = arith.constant 0 : index
    %32 = vector.load %arg0[%c2_25, %c0_26, %c0_27] : memref<4x12x64xf32, #tpu.memory_space<vmem>>, vector<1x12x64xf32>
    %33 = vector.shape_cast %32 : vector<1x12x64xf32> to vector<12x64xf32>
    %34 = arith.truncf %33 : vector<12x64xf32> to vector<12x64xbf16>
    %c1_28 = arith.constant 1 : index
    %c0_29 = arith.constant 0 : index
    %c0_30 = arith.constant 0 : index
    %35 = vector.load %arg0[%c1_28, %c0_29, %c0_30] : memref<4x12x64xf32, #tpu.memory_space<vmem>>, vector<1x12x64xf32>
    %36 = vector.shape_cast %35 : vector<1x12x64xf32> to vector<12x64xf32>
    %37 = arith.truncf %36 : vector<12x64xf32> to vector<12x64xbf16>
    %cst_31 = arith.constant dense<0.000000e+00> : vector<12x256xf32>
    %38 = tpu.matmul %34, %0, %cst_31 {dimension_numbers = #tpu.dot_dimension_numbers<[1], [0], [0], [1], [0, 0, 1, 1], [], []>} : vector<12x64xbf16>, vector<64x256xbf16>, vector<12x256xf32> -> vector<12x256xf32>
    %cst_32 = arith.constant dense<0.000000e+00> : vector<12x256xf32>
    %39 = tpu.matmul %37, %1, %cst_32 {dimension_numbers = #tpu.dot_dimension_numbers<[1], [0], [0], [1], [0, 0, 1, 1], [], []>} : vector<12x64xbf16>, vector<64x256xbf16>, vector<12x256xf32> -> vector<12x256xf32>
    %40 = arith.addf %38, %39 : vector<12x256xf32>
    %41 = vector.broadcast %3 : vector<1x256xf32> to vector<12x256xf32>
    %42 = arith.addf %40, %41 : vector<12x256xf32>
    %c2_33 = arith.constant 2 : index
    %c0_34 = arith.constant 0 : index
    %c0_35 = arith.constant 0 : index
    %43 = vector.load %arg8[%c2_33, %c0_34, %c0_35] : memref<4x12x256xf32, #tpu.memory_space<vmem>>, vector<1x12x256xf32>
    %44 = vector.shape_cast %43 : vector<1x12x256xf32> to vector<12x256xf32>
    %45 = vector.shape_cast %42 : vector<12x256xf32> to vector<1x12x256xf32>
    tpu.vector_store %arg8[%c2_33, %c0_34, %c0_35], %45 {strides = array<i32>} : memref<4x12x256xf32, #tpu.memory_space<vmem>>, vector<1x12x256xf32>,
    %c3_36 = arith.constant 3 : index
    %c0_37 = arith.constant 0 : index
    %c0_38 = arith.constant 0 : index
    %46 = vector.load %arg0[%c3_36, %c0_37, %c0_38] : memref<4x12x64xf32, #tpu.memory_space<vmem>>, vector<1x12x64xf32>
    %47 = vector.shape_cast %46 : vector<1x12x64xf32> to vector<12x64xf32>
    %48 = arith.truncf %47 : vector<12x64xf32> to vector<12x64xbf16>
    %c0_39 = arith.constant 0 : index
    %c0_40 = arith.constant 0 : index
    %c0_41 = arith.constant 0 : index
    %49 = vector.load %arg0[%c0_39, %c0_40, %c0_41] : memref<4x12x64xf32, #tpu.memory_space<vmem>>, vector<1x12x64xf32>
    %50 = vector.shape_cast %49 : vector<1x12x64xf32> to vector<12x64xf32>
    %51 = arith.truncf %50 : vector<12x64xf32> to vector<12x64xbf16>
    %cst_42 = arith.constant dense<0.000000e+00> : vector<12x256xf32>
    %52 = tpu.matmul %48, %0, %cst_42 {dimension_numbers = #tpu.dot_dimension_numbers<[1], [0], [0], [1], [0, 0, 1, 1], [], []>} : vector<12x64xbf16>, vector<64x256xbf16>, vector<12x256xf32> -> vector<12x256xf32>
    %cst_43 = arith.constant dense<0.000000e+00> : vector<12x256xf32>
    %53 = tpu.matmul %51, %1, %cst_43 {dimension_numbers = #tpu.dot_dimension_numbers<[1], [0], [0], [1], [0, 0, 1, 1], [], []>} : vector<12x64xbf16>, vector<64x256xbf16>, vector<12x256xf32> -> vector<12x256xf32>
    %54 = arith.addf %52, %53 : vector<12x256xf32>
    %55 = vector.broadcast %3 : vector<1x256xf32> to vector<12x256xf32>
    %56 = arith.addf %54, %55 : vector<12x256xf32>
    %c3_44 = arith.constant 3 : index
    %c0_45 = arith.constant 0 : index
    %c0_46 = arith.constant 0 : index
    %57 = vector.load %arg8[%c3_44, %c0_45, %c0_46] : memref<4x12x256xf32, #tpu.memory_space<vmem>>, vector<1x12x256xf32>
    %58 = vector.shape_cast %57 : vector<1x12x256xf32> to vector<12x256xf32>
    %59 = vector.shape_cast %56 : vector<12x256xf32> to vector<1x12x256xf32>
    tpu.vector_store %arg8[%c3_44, %c0_45, %c0_46], %59 {strides = array<i32>} : memref<4x12x256xf32, #tpu.memory_space<vmem>>, vector<1x12x256xf32>,
    %cst_47 = arith.constant 0.000000e+00 : f32
    %60 = vector.broadcast %cst_47 : f32 to vector<12x64xf32>
    %cst_48 = arith.constant 0.000000e+00 : f32
    %61 = vector.broadcast %cst_48 : f32 to vector<12x64xf32>
    %62 = arith.truncf %60 : vector<12x64xf32> to vector<12x64xbf16>
    %cst_49 = arith.constant dense<0.000000e+00> : vector<12x256xf32>
    %63 = tpu.matmul %62, %2, %cst_49 {dimension_numbers = #tpu.dot_dimension_numbers<[1], [0], [0], [1], [0, 0, 1, 1], [], []>} : vector<12x64xbf16>, vector<64x256xbf16>, vector<12x256xf32> -> vector<12x256xf32>
    %c0_50 = arith.constant 0 : index
    %c0_51 = arith.constant 0 : index
    %c0_52 = arith.constant 0 : index
    %64 = vector.load %arg8[%c0_50, %c0_51, %c0_52] : memref<4x12x256xf32, #tpu.memory_space<vmem>>, vector<1x12x256xf32>
    %65 = vector.shape_cast %64 : vector<1x12x256xf32> to vector<12x256xf32>
    %66 = arith.addf %65, %63 : vector<12x256xf32>
    %67 = vector.extract_strided_slice %66 {offsets = [0, 0], sizes = [12, 192], strides = [1, 1]} : vector<12x256xf32> to vector<12x192xf32>
    %68 = arith.negf %67 : vector<12x192xf32>
    %69 = math.exp %68 : vector<12x192xf32>
    %cst_53 = arith.constant 1.000000e+00 : f32
    %70 = vector.broadcast %cst_53 : f32 to vector<12x192xf32>
    %71 = arith.addf %70, %69 : vector<12x192xf32>
    %72 = arith.divf %70, %71 : vector<12x192xf32>
    %73 = vector.extract_strided_slice %66 {offsets = [0, 192], sizes = [12, 64], strides = [1, 1]} : vector<12x256xf32> to vector<12x64xf32>
    %74 = math.tanh %73 : vector<12x64xf32>
    %75 = vector.extract_strided_slice %72 {offsets = [0, 0], sizes = [12, 64], strides = [1, 1]} : vector<12x192xf32> to vector<12x64xf32>
    %76 = vector.extract_strided_slice %72 {offsets = [0, 64], sizes = [12, 64], strides = [1, 1]} : vector<12x192xf32> to vector<12x64xf32>
    %77 = vector.extract_strided_slice %72 {offsets = [0, 128], sizes = [12, 64], strides = [1, 1]} : vector<12x192xf32> to vector<12x64xf32>
    %78 = arith.mulf %76, %61 : vector<12x64xf32>
    %79 = arith.mulf %75, %74 : vector<12x64xf32>
    %80 = arith.addf %78, %79 : vector<12x64xf32>
    %81 = math.tanh %80 : vector<12x64xf32>
    %82 = arith.mulf %77, %81 : vector<12x64xf32>
    %83 = vector.extract_strided_slice %82 {offsets = [0, 0], sizes = [12, 32], strides = [1, 1]} : vector<12x64xf32> to vector<12x32xf32>
    %cst_54 = arith.constant dense<0.000000e+00> : vector<12xf32>
    %84 = vector.multi_reduction <add>, %83, %cst_54 [1] : vector<12x32xf32> to vector<12xf32>
    %85 = vector.shape_cast %84 : vector<12xf32> to vector<12x1xf32>
    %86 = vector.extract_strided_slice %82 {offsets = [0, 32], sizes = [12, 32], strides = [1, 1]} : vector<12x64xf32> to vector<12x32xf32>
    %cst_55 = arith.constant dense<0.000000e+00> : vector<12xf32>
    %87 = vector.multi_reduction <add>, %86, %cst_55 [1] : vector<12x32xf32> to vector<12xf32>
    %88 = vector.shape_cast %87 : vector<12xf32> to vector<12x1xf32>
    %89 = arith.truncf %82 : vector<12x64xf32> to vector<12x64xbf16>
    %cst_56 = arith.constant dense<0.000000e+00> : vector<12x256xf32>
    %90 = tpu.matmul %89, %2, %cst_56 {dimension_numbers = #tpu.dot_dimension_numbers<[1], [0], [0], [1], [0, 0, 1, 1], [], []>} : vector<12x64xbf16>, vector<64x256xbf16>, vector<12x256xf32> -> vector<12x256xf32>
    %c1_57 = arith.constant 1 : index
    %c0_58 = arith.constant 0 : index
    %c0_59 = arith.constant 0 : index
    %91 = vector.load %arg8[%c1_57, %c0_58, %c0_59] : memref<4x12x256xf32, #tpu.memory_space<vmem>>, vector<1x12x256xf32>
    %92 = vector.shape_cast %91 : vector<1x12x256xf32> to vector<12x256xf32>
    %93 = arith.addf %92, %90 : vector<12x256xf32>
    %94 = vector.extract_strided_slice %93 {offsets = [0, 0], sizes = [12, 192], strides = [1, 1]} : vector<12x256xf32> to vector<12x192xf32>
    %95 = arith.negf %94 : vector<12x192xf32>
    %96 = math.exp %95 : vector<12x192xf32>
    %cst_60 = arith.constant 1.000000e+00 : f32
    %97 = vector.broadcast %cst_60 : f32 to vector<12x192xf32>
    %98 = arith.addf %97, %96 : vector<12x192xf32>
    %99 = arith.divf %97, %98 : vector<12x192xf32>
    %100 = vector.extract_strided_slice %93 {offsets = [0, 192], sizes = [12, 64], strides = [1, 1]} : vector<12x256xf32> to vector<12x64xf32>
    %101 = math.tanh %100 : vector<12x64xf32>
    %102 = vector.extract_strided_slice %99 {offsets = [0, 0], sizes = [12, 64], strides = [1, 1]} : vector<12x192xf32> to vector<12x64xf32>
    %103 = vector.extract_strided_slice %99 {offsets = [0, 64], sizes = [12, 64], strides = [1, 1]} : vector<12x192xf32> to vector<12x64xf32>
    %104 = vector.extract_strided_slice %99 {offsets = [0, 128], sizes = [12, 64], strides = [1, 1]} : vector<12x192xf32> to vector<12x64xf32>
    %105 = arith.mulf %103, %80 : vector<12x64xf32>
    %106 = arith.mulf %102, %101 : vector<12x64xf32>
    %107 = arith.addf %105, %106 : vector<12x64xf32>
    %108 = math.tanh %107 : vector<12x64xf32>
    %109 = arith.mulf %104, %108 : vector<12x64xf32>
    %110 = vector.extract_strided_slice %109 {offsets = [0, 0], sizes = [12, 32], strides = [1, 1]} : vector<12x64xf32> to vector<12x32xf32>
    %cst_61 = arith.constant dense<0.000000e+00> : vector<12xf32>
    %111 = vector.multi_reduction <add>, %110, %cst_61 [1] : vector<12x32xf32> to vector<12xf32>
    %112 = vector.shape_cast %111 : vector<12xf32> to vector<12x1xf32>
    %113 = vector.extract_strided_slice %109 {offsets = [0, 32], sizes = [12, 32], strides = [1, 1]} : vector<12x64xf32> to vector<12x32xf32>
    %cst_62 = arith.constant dense<0.000000e+00> : vector<12xf32>
    %114 = vector.multi_reduction <add>, %113, %cst_62 [1] : vector<12x32xf32> to vector<12xf32>
    %115 = vector.shape_cast %114 : vector<12xf32> to vector<12x1xf32>
    %116 = arith.truncf %109 : vector<12x64xf32> to vector<12x64xbf16>
    %cst_63 = arith.constant dense<0.000000e+00> : vector<12x256xf32>
    %117 = tpu.matmul %116, %2, %cst_63 {dimension_numbers = #tpu.dot_dimension_numbers<[1], [0], [0], [1], [0, 0, 1, 1], [], []>} : vector<12x64xbf16>, vector<64x256xbf16>, vector<12x256xf32> -> vector<12x256xf32>
    %c2_64 = arith.constant 2 : index
    %c0_65 = arith.constant 0 : index
    %c0_66 = arith.constant 0 : index
    %118 = vector.load %arg8[%c2_64, %c0_65, %c0_66] : memref<4x12x256xf32, #tpu.memory_space<vmem>>, vector<1x12x256xf32>
    %119 = vector.shape_cast %118 : vector<1x12x256xf32> to vector<12x256xf32>
    %120 = arith.addf %119, %117 : vector<12x256xf32>
    %121 = vector.extract_strided_slice %120 {offsets = [0, 0], sizes = [12, 192], strides = [1, 1]} : vector<12x256xf32> to vector<12x192xf32>
    %122 = arith.negf %121 : vector<12x192xf32>
    %123 = math.exp %122 : vector<12x192xf32>
    %cst_67 = arith.constant 1.000000e+00 : f32
    %124 = vector.broadcast %cst_67 : f32 to vector<12x192xf32>
    %125 = arith.addf %124, %123 : vector<12x192xf32>
    %126 = arith.divf %124, %125 : vector<12x192xf32>
    %127 = vector.extract_strided_slice %120 {offsets = [0, 192], sizes = [12, 64], strides = [1, 1]} : vector<12x256xf32> to vector<12x64xf32>
    %128 = math.tanh %127 : vector<12x64xf32>
    %129 = vector.extract_strided_slice %126 {offsets = [0, 0], sizes = [12, 64], strides = [1, 1]} : vector<12x192xf32> to vector<12x64xf32>
    %130 = vector.extract_strided_slice %126 {offsets = [0, 64], sizes = [12, 64], strides = [1, 1]} : vector<12x192xf32> to vector<12x64xf32>
    %131 = vector.extract_strided_slice %126 {offsets = [0, 128], sizes = [12, 64], strides = [1, 1]} : vector<12x192xf32> to vector<12x64xf32>
    %132 = arith.mulf %130, %107 : vector<12x64xf32>
    %133 = arith.mulf %129, %128 : vector<12x64xf32>
    %134 = arith.addf %132, %133 : vector<12x64xf32>
    %135 = math.tanh %134 : vector<12x64xf32>
    %136 = arith.mulf %131, %135 : vector<12x64xf32>
    %137 = vector.extract_strided_slice %136 {offsets = [0, 0], sizes = [12, 32], strides = [1, 1]} : vector<12x64xf32> to vector<12x32xf32>
    %cst_68 = arith.constant dense<0.000000e+00> : vector<12xf32>
    %138 = vector.multi_reduction <add>, %137, %cst_68 [1] : vector<12x32xf32> to vector<12xf32>
    %139 = vector.shape_cast %138 : vector<12xf32> to vector<12x1xf32>
    %140 = vector.extract_strided_slice %136 {offsets = [0, 32], sizes = [12, 32], strides = [1, 1]} : vector<12x64xf32> to vector<12x32xf32>
    %cst_69 = arith.constant dense<0.000000e+00> : vector<12xf32>
    %141 = vector.multi_reduction <add>, %140, %cst_69 [1] : vector<12x32xf32> to vector<12xf32>
    %142 = vector.shape_cast %141 : vector<12xf32> to vector<12x1xf32>
    %143 = arith.truncf %136 : vector<12x64xf32> to vector<12x64xbf16>
    %cst_70 = arith.constant dense<0.000000e+00> : vector<12x256xf32>
    %144 = tpu.matmul %143, %2, %cst_70 {dimension_numbers = #tpu.dot_dimension_numbers<[1], [0], [0], [1], [0, 0, 1, 1], [], []>} : vector<12x64xbf16>, vector<64x256xbf16>, vector<12x256xf32> -> vector<12x256xf32>
    %c3_71 = arith.constant 3 : index
    %c0_72 = arith.constant 0 : index
    %c0_73 = arith.constant 0 : index
    %145 = vector.load %arg8[%c3_71, %c0_72, %c0_73] : memref<4x12x256xf32, #tpu.memory_space<vmem>>, vector<1x12x256xf32>
    %146 = vector.shape_cast %145 : vector<1x12x256xf32> to vector<12x256xf32>
    %147 = arith.addf %146, %144 : vector<12x256xf32>
    %148 = vector.extract_strided_slice %147 {offsets = [0, 0], sizes = [12, 192], strides = [1, 1]} : vector<12x256xf32> to vector<12x192xf32>
    %149 = arith.negf %148 : vector<12x192xf32>
    %150 = math.exp %149 : vector<12x192xf32>
    %cst_74 = arith.constant 1.000000e+00 : f32
    %151 = vector.broadcast %cst_74 : f32 to vector<12x192xf32>
    %152 = arith.addf %151, %150 : vector<12x192xf32>
    %153 = arith.divf %151, %152 : vector<12x192xf32>
    %154 = vector.extract_strided_slice %147 {offsets = [0, 192], sizes = [12, 64], strides = [1, 1]} : vector<12x256xf32> to vector<12x64xf32>
    %155 = math.tanh %154 : vector<12x64xf32>
    %156 = vector.extract_strided_slice %153 {offsets = [0, 0], sizes = [12, 64], strides = [1, 1]} : vector<12x192xf32> to vector<12x64xf32>
    %157 = vector.extract_strided_slice %153 {offsets = [0, 64], sizes = [12, 64], strides = [1, 1]} : vector<12x192xf32> to vector<12x64xf32>
    %158 = vector.extract_strided_slice %153 {offsets = [0, 128], sizes = [12, 64], strides = [1, 1]} : vector<12x192xf32> to vector<12x64xf32>
    %159 = arith.mulf %157, %134 : vector<12x64xf32>
    %160 = arith.mulf %156, %155 : vector<12x64xf32>
    %161 = arith.addf %159, %160 : vector<12x64xf32>
    %162 = math.tanh %161 : vector<12x64xf32>
    %163 = arith.mulf %158, %162 : vector<12x64xf32>
    %164 = vector.extract_strided_slice %163 {offsets = [0, 0], sizes = [12, 32], strides = [1, 1]} : vector<12x64xf32> to vector<12x32xf32>
    %cst_75 = arith.constant dense<0.000000e+00> : vector<12xf32>
    %165 = vector.multi_reduction <add>, %164, %cst_75 [1] : vector<12x32xf32> to vector<12xf32>
    %166 = vector.shape_cast %165 : vector<12xf32> to vector<12x1xf32>
    %167 = vector.extract_strided_slice %163 {offsets = [0, 32], sizes = [12, 32], strides = [1, 1]} : vector<12x64xf32> to vector<12x32xf32>
    %cst_76 = arith.constant dense<0.000000e+00> : vector<12xf32>
    %168 = vector.multi_reduction <add>, %167, %cst_76 [1] : vector<12x32xf32> to vector<12xf32>
    %169 = vector.shape_cast %168 : vector<12xf32> to vector<12x1xf32>
    %c0_77 = arith.constant 0 : index
    %c0_78 = arith.constant 0 : index
    %170 = vector.load %arg5[%c0_77, %c0_78] : memref<12x2xf32, #tpu.memory_space<vmem>>, vector<12x2xf32>
    %171 = arith.addf %85, %169 : vector<12x1xf32>
    %cst_79 = arith.constant 1.562500e-02 : f32
    %172 = vector.broadcast %cst_79 : f32 to vector<12x1xf32>
    %173 = arith.mulf %171, %172 : vector<12x1xf32>
    %174 = vector.broadcast %173 : vector<12x1xf32> to vector<12x2xf32>
    %175 = arith.mulf %174, %170 : vector<12x2xf32>
    %cst_80 = arith.constant dense<0.000000e+00> : vector<2xf32>
    %176 = vector.multi_reduction <add>, %175, %cst_80 [0] : vector<12x2xf32> to vector<2xf32>
    %177 = vector.shape_cast %176 : vector<2xf32> to vector<1x2xf32>
    %178 = arith.addf %112, %142 : vector<12x1xf32>
    %cst_81 = arith.constant 1.562500e-02 : f32
    %179 = vector.broadcast %cst_81 : f32 to vector<12x1xf32>
    %180 = arith.mulf %178, %179 : vector<12x1xf32>
    %181 = vector.broadcast %180 : vector<12x1xf32> to vector<12x2xf32>
    %182 = arith.mulf %181, %170 : vector<12x2xf32>
    %cst_82 = arith.constant dense<0.000000e+00> : vector<2xf32>
    %183 = vector.multi_reduction <add>, %182, %cst_82 [0] : vector<12x2xf32> to vector<2xf32>
    %184 = vector.shape_cast %183 : vector<2xf32> to vector<1x2xf32>
    %185 = arith.addf %139, %115 : vector<12x1xf32>
    %cst_83 = arith.constant 1.562500e-02 : f32
    %186 = vector.broadcast %cst_83 : f32 to vector<12x1xf32>
    %187 = arith.mulf %185, %186 : vector<12x1xf32>
    %188 = vector.broadcast %187 : vector<12x1xf32> to vector<12x2xf32>
    %189 = arith.mulf %188, %170 : vector<12x2xf32>
    %cst_84 = arith.constant dense<0.000000e+00> : vector<2xf32>
    %190 = vector.multi_reduction <add>, %189, %cst_84 [0] : vector<12x2xf32> to vector<2xf32>
    %191 = vector.shape_cast %190 : vector<2xf32> to vector<1x2xf32>
    %192 = arith.addf %166, %88 : vector<12x1xf32>
    %cst_85 = arith.constant 1.562500e-02 : f32
    %193 = vector.broadcast %cst_85 : f32 to vector<12x1xf32>
    %194 = arith.mulf %192, %193 : vector<12x1xf32>
    %195 = vector.broadcast %194 : vector<12x1xf32> to vector<12x2xf32>
    %196 = arith.mulf %195, %170 : vector<12x2xf32>
    %cst_86 = arith.constant dense<0.000000e+00> : vector<2xf32>
    %197 = vector.multi_reduction <add>, %196, %cst_86 [0] : vector<12x2xf32> to vector<2xf32>
    %198 = vector.shape_cast %197 : vector<2xf32> to vector<1x2xf32>
    %199 = tpu.concatenate %177, %184, %191, %198 in 0 : vector<1x2xf32>, vector<1x2xf32>, vector<1x2xf32>, vector<1x2xf32> -> vector<4x2xf32>
    %c0_87 = arith.constant 0 : index
    %c0_88 = arith.constant 0 : index
    %200 = vector.load %arg6[%c0_87, %c0_88] : memref<1x2xf32, #tpu.memory_space<vmem>>, vector<1x2xf32>
    %201 = vector.broadcast %200 : vector<1x2xf32> to vector<4x2xf32>
    %202 = arith.addf %199, %201 : vector<4x2xf32>
    %c0_89 = arith.constant 0 : index
    %c0_90 = arith.constant 0 : index
    %203 = vector.load %arg7[%c0_89, %c0_90] : memref<4x2xf32, #tpu.memory_space<vmem>>, vector<4x2xf32>
    tpu.vector_store %arg7[%c0_89, %c0_90], %202 {strides = array<i32>} : memref<4x2xf32, #tpu.memory_space<vmem>>, vector<4x2xf32>,
    return
  }
}

</mosaic_0001>

<llo_original>
// kernel: brnn_forward.1
$region0: #{brnn_forward.1}
  #allocation0 [shape = 'u32[]', space=smem, size = 0x4, offset = 0x4, fixed_abs, tag = 'smem constant byte address 0x4 - core index']
  #allocation1 [shape = 'u32[144,128]{1,0:T(1,128)}', space=vmem, size = 0x12000, scoped, tag = 'internal scratch']
  #allocation2 [shape = 'f32[4,12,256]{2,1,0:T(8,128)}', space=vmem, size = 0x10000, scoped, tag = 'scratch operand']
  %s0 = inlined_call_operand.vmem [shape: f32[4,12,64], index: 0, kind: input, shape index: {}]
  %s1 = inlined_call_operand.vmem [shape: bf16[64,256], index: 1, kind: input, shape index: {}]
  %s2 = inlined_call_operand.vmem [shape: bf16[64,256], index: 2, kind: input, shape index: {}]
  %s3 = inlined_call_operand.hbm [shape: bf16[64,256], index: 3, kind: input, shape index: {}]
  %s4 = inlined_call_operand.vmem [shape: f32[1,256], index: 4, kind: input, shape index: {}]
  %s5 = inlined_call_operand.vmem [shape: f32[12,2], index: 5, kind: input, shape index: {}]
  %s6 = inlined_call_operand.vmem [shape: f32[1,2], index: 6, kind: input, shape index: {}]
  %s7 = inlined_call_operand.vmem [shape: f32[4,2], index: 7, kind: output, shape index: {}]
  %s8 = sld [smem:[#allocation0]]
  $region42: #{brnn_forward.1} parent=0
    _
  %s10 = ssub.s32 1, %s8
  %s11 = scalar_select 0, %s10, %s8
  $region1: #{brnn_forward.1} parent=0
    #allocation3 [shape = 'u8[32768]{0}', space=vmem, size = 0x8000, scoped, tag = 'input window, operand 3, single buffered']
    #allocation4 [shape = 's32[1]{0}', space=sflag, size = 0x4, scoped, tag = 'scoped memory for brnn_forward.1']
    %12 = vsyncpa [#allocation4], 0
    // Predicated region
    $region2: #{brnn_forward.1} parent=1 // pred_check
      _
    $region3: #{brnn_forward.1} parent=1 // pred_check_branch
      %14 = sbr.rel (0) target = $region5
    $region4: #{brnn_forward.1} parent=1 // pred_region
      _
    $region5: #{brnn_forward.1} parent=1 // pred_fallthru
      _
    // Predicated region
    $region6: #{brnn_forward.1} parent=1 // pred_check
      _
    $region7: #{brnn_forward.1} parent=1 // pred_check_branch
      %16 = sbr.rel (0) target = $region9
    $region8: #{brnn_forward.1} parent=1 // pred_region
      _
    $region9: #{brnn_forward.1} parent=1 // pred_fallthru
      _
    // Predicated region
    $region10: #{brnn_forward.1} parent=1 // pred_check
      _
    $region11: #{brnn_forward.1} parent=1 // pred_check_branch
      %18 = sbr.rel (0) target = $region13
    $region12: #{brnn_forward.1} parent=1 // pred_region
      _
    $region13: #{brnn_forward.1} parent=1 // pred_fallthru
      _
    // Predicated region
    $region14: #{brnn_forward.1} parent=1 // pred_check
      _
    $region15: #{brnn_forward.1} parent=1 // pred_check_branch
      %20 = sbr.rel (0) target = $region17
    $region16: #{brnn_forward.1} parent=1 // pred_region
      %s22 = ssub.s32 1024, 1024
      %23 = vsyncadd [#allocation4], %s22
      %s24 = sshll.u32 [#allocation3], 4
      %s25 = int_to_ptr.vmem [resolvable:$true] %s24
      %30 = dma.hbm_to_vmem [thread:$0]  %s3, 1024, %s25, [#allocation4], 128, 128, 8
    $region17: #{brnn_forward.1} parent=1 // pred_fallthru
      _
    // Predicated region
    $region18: #{brnn_forward.1} parent=1 // pred_check
      _
    $region19: #{brnn_forward.1} parent=1 // pred_check_branch
      %32 = sbr.rel (0) target = $region21
    $region20: #{brnn_forward.1} parent=1 // pred_region
      _
    $region21: #{brnn_forward.1} parent=1 // pred_fallthru
      _
    // Predicated region
    $region22: #{brnn_forward.1} parent=1 // pred_check
      _
    $region23: #{brnn_forward.1} parent=1 // pred_check_branch
      %34 = sbr.rel (0) target = $region25
    $region24: #{brnn_forward.1} parent=1 // pred_region
      _
    $region25: #{brnn_forward.1} parent=1 // pred_fallthru
      _
    // Predicated region
    $region26: #{brnn_forward.1} parent=1 // pred_check
      _
    $region27: #{brnn_forward.1} parent=1 // pred_check_branch
      %36 = sbr.rel (0) target = $region29
    $region28: #{brnn_forward.1} parent=1 // pred_region
      _
    $region29: #{brnn_forward.1} parent=1 // pred_fallthru
      _
    // Predicated region
    $region30: #{brnn_forward.1} parent=1 // pred_check
      _
    $region31: #{brnn_forward.1} parent=1 // pred_check_branch
      %38 = sbr.rel (0) target = $region33
    $region32: #{brnn_forward.1} parent=1 // pred_region
      %39 = dma.done [#allocation4], 1024
    $region33: #{brnn_forward.1} parent=1 // pred_fallthru
      _
    %v41 = vld [vmem:[%s1] sm:$0xff]
    %v42 = vld [vmem:[%s1 + $0x8] sm:$0xff]
    %v43 = vld [vmem:[%s1 + $0x10] sm:$0xff]
    %v44 = vld [vmem:[%s1 + $0x18] sm:$0xff]
    %v45 = vld [vmem:[%s1 + $0x20] sm:$0xff]
    %v46 = vld [vmem:[%s1 + $0x28] sm:$0xff]
    %v47 = vld [vmem:[%s1 + $0x30] sm:$0xff]
    %v48 = vld [vmem:[%s1 + $0x38] sm:$0xff]
    %v49 = vld [vmem:[%s2] sm:$0xff]
    %v50 = vld [vmem:[%s2 + $0x8] sm:$0xff]
    %v51 = vld [vmem:[%s2 + $0x10] sm:$0xff]
    %v52 = vld [vmem:[%s2 + $0x18] sm:$0xff]
    %v53 = vld [vmem:[%s2 + $0x20] sm:$0xff]
    %v54 = vld [vmem:[%s2 + $0x28] sm:$0xff]
    %v55 = vld [vmem:[%s2 + $0x30] sm:$0xff]
    %v56 = vld [vmem:[%s2 + $0x38] sm:$0xff]
    %v57 = vld [vmem:[#allocation3] sm:$0xff]
    %v58 = vld [vmem:[#allocation3 + $0x8] sm:$0xff]
    %v59 = vld [vmem:[#allocation3 + $0x10] sm:$0xff]
    %v60 = vld [vmem:[#allocation3 + $0x18] sm:$0xff]
    %v61 = vld [vmem:[#allocation3 + $0x20] sm:$0xff]
    %v62 = vld [vmem:[#allocation3 + $0x28] sm:$0xff]
    %v63 = vld [vmem:[#allocation3 + $0x30] sm:$0xff]
    %v64 = vld [vmem:[#allocation3 + $0x38] sm:$0xff]
    %v65 = vld [vmem:[%s4] sm:$0x3]
    %v66 = vld [vmem:[%s0] sm:$0xff]
    %v67 = vld [vmem:[%s0 + $0x8] sm:$0xf]
    %v68 = vpack.c.bf16 %v67, %v66
    %s69 = scalar_lea.vmem %s0, 48
    %v70 = vld [vmem:[%s69] sm:$0xff]
    %v71 = vld [vmem:[%s69 + $0x8] sm:$0xf]
    %v72 = vpack.c.bf16 %v71, %v70
    %v81 = vunpack.c.l.b16 %v49
    %v82 = vunpack.c.h.b16 %v49
    %v83 = vunpack.c.l.b16 %v50
    %v84 = vunpack.c.h.b16 %v50
    %v85 = vunpack.c.l.b16 %v51
    %v86 = vunpack.c.h.b16 %v51
    %v87 = vunpack.c.l.b16 %v52
    %v88 = vunpack.c.h.b16 %v52
    %v89 = vunpack.c.l.b16 %v53
    %v90 = vunpack.c.h.b16 %v53
    %v91 = vunpack.c.l.b16 %v54
    %v92 = vunpack.c.h.b16 %v54
    %v93 = vunpack.c.l.b16 %v55
    %v94 = vunpack.c.h.b16 %v55
    %v95 = vunpack.c.l.b16 %v56
    %v96 = vunpack.c.h.b16 %v56
    %v97 = vpack.c.b16 %v83, %v81
    %v98 = vpack.c.b16 %v84, %v82
    %v99 = vpack.c.b16 %v87, %v85
    %v100 = vpack.c.b16 %v88, %v86
    %v101 = vpack.c.b16 %v91, %v89
    %v102 = vpack.c.b16 %v92, %v90
    %v103 = vpack.c.b16 %v95, %v93
    %v104 = vpack.c.b16 %v96, %v94
    %vm113 = vcmask 523264
    %v115 = vsel %vm113, %v72, 0
    %117 = vmatprep.subr.bf16.mxu0 0
    %118 = vmatpush1.bf16.msra.mxu0 0
    %119 = vmatprep.subr.bf16.mxu0 0
    %120 = vmatpush1.bf16.msra.mxu0 0
    %121 = vmatprep.subr.bf16.mxu0 0
    %122 = vmatpush1.bf16.msra.mxu0 0
    %123 = vmatprep.subr.bf16.mxu0 0
    %124 = vmatpush1.bf16.msra.mxu0 0
    %125 = vmatprep.subr.bf16.mxu0 %v104
    %126 = vmatpush1.bf16.msra.mxu0 %v103
    %127 = vmatprep.subr.bf16.mxu0 %v102
    %128 = vmatpush1.bf16.msra.mxu0 %v101
    %129 = vmatprep.subr.bf16.mxu0 %v100
    %130 = vmatpush1.bf16.msra.mxu0 %v99
    %131 = vmatprep.subr.bf16.mxu0 %v98
    %132 = vmatpush1.bf16.msra.mxu0 %v97
    %133 = vmatprep.subr.bf16.mxu0 0
    %134 = vmatpush2.bf16.msra.mxu0 0
    %135 = vmatprep.subr.bf16.mxu0 0
    %136 = vmatpush2.bf16.msra.mxu0 0
    %137 = vmatprep.subr.bf16.mxu0 0
    %138 = vmatpush2.bf16.msra.mxu0 0
    %139 = vmatprep.subr.bf16.mxu0 0
    %140 = vmatpush2.bf16.msra.mxu0 0
    %141 = vmatprep.subr.bf16.mxu0 0
    %142 = vmatpush2.bf16.msra.mxu0 0
    %143 = vmatprep.subr.bf16.mxu0 0
    %144 = vmatpush2.bf16.msra.mxu0 0
    %145 = vmatprep.subr.bf16.mxu0 0
    %146 = vmatpush2.bf16.msra.mxu0 0
    %147 = vmatprep.subr.bf16.mxu0 0
    %148 = vmatpush2.bf16.msra.mxu0 0
    %149 = vmatprep.mubr.bf16.mxu0 0
    %150 = vmatmul.mubr.bf16.gmra.mxu0 %v115
    %v151 = vpop.f32.mrf.mxu0
    %v152 = vadd.f32 0.0, %v151
    %v153 = vpop.f32.mrf.mxu0
    %v154 = vadd.f32 0.0, %v153
    %v155 = vpop.f32.mrf.mxu0
    %v156 = vadd.f32 0.0, %v155
    %v157 = vpop.f32.mrf.mxu0
    %v158 = vadd.f32 0.0, %v157
    %159 = vdwg.mxu0
    %v168 = vunpack.c.l.b16 %v41
    %v169 = vunpack.c.h.b16 %v41
    %v170 = vunpack.c.l.b16 %v42
    %v171 = vunpack.c.h.b16 %v42
    %v172 = vunpack.c.l.b16 %v43
    %v173 = vunpack.c.h.b16 %v43
    %v174 = vunpack.c.l.b16 %v44
    %v175 = vunpack.c.h.b16 %v44
    %v176 = vunpack.c.l.b16 %v45
    %v177 = vunpack.c.h.b16 %v45
    %v178 = vunpack.c.l.b16 %v46
    %v179 = vunpack.c.h.b16 %v46
    %v180 = vunpack.c.l.b16 %v47
    %v181 = vunpack.c.h.b16 %v47
    %v182 = vunpack.c.l.b16 %v48
    %v183 = vunpack.c.h.b16 %v48
    %v184 = vpack.c.b16 %v170, %v168
    %v185 = vpack.c.b16 %v171, %v169
    %v186 = vpack.c.b16 %v174, %v172
    %v187 = vpack.c.b16 %v175, %v173
    %v188 = vpack.c.b16 %v178, %v176
    %v189 = vpack.c.b16 %v179, %v177
    %v190 = vpack.c.b16 %v182, %v180
    %v191 = vpack.c.b16 %v183, %v181
    %v201 = vsel %vm113, %v68, 0
    %203 = vmatprep.subr.bf16.mxu0 0
    %204 = vmatpush1.bf16.msra.mxu0 0
    %205 = vmatprep.subr.bf16.mxu0 0
    %206 = vmatpush1.bf16.msra.mxu0 0
    %207 = vmatprep.subr.bf16.mxu0 0
    %208 = vmatpush1.bf16.msra.mxu0 0
    %209 = vmatprep.subr.bf16.mxu0 0
    %210 = vmatpush1.bf16.msra.mxu0 0
    %211 = vmatprep.subr.bf16.mxu0 %v191
    %212 = vmatpush1.bf16.msra.mxu0 %v190
    %213 = vmatprep.subr.bf16.mxu0 %v189
    %214 = vmatpush1.bf16.msra.mxu0 %v188
    %215 = vmatprep.subr.bf16.mxu0 %v187
    %216 = vmatpush1.bf16.msra.mxu0 %v186
    %217 = vmatprep.subr.bf16.mxu0 %v185
    %218 = vmatpush1.bf16.msra.mxu0 %v184
    %219 = vmatprep.subr.bf16.mxu0 0
    %220 = vmatpush2.bf16.msra.mxu0 0
    %221 = vmatprep.subr.bf16.mxu0 0
    %222 = vmatpush2.bf16.msra.mxu0 0
    %223 = vmatprep.subr.bf16.mxu0 0
    %224 = vmatpush2.bf16.msra.mxu0 0
    %225 = vmatprep.subr.bf16.mxu0 0
    %226 = vmatpush2.bf16.msra.mxu0 0
    %227 = vmatprep.subr.bf16.mxu0 0
    %228 = vmatpush2.bf16.msra.mxu0 0
    %229 = vmatprep.subr.bf16.mxu0 0
    %230 = vmatpush2.bf16.msra.mxu0 0
    %231 = vmatprep.subr.bf16.mxu0 0
    %232 = vmatpush2.bf16.msra.mxu0 0
    %233 = vmatprep.subr.bf16.mxu0 0
    %234 = vmatpush2.bf16.msra.mxu0 0
    %235 = vmatprep.mubr.bf16.mxu0 0
    %236 = vmatmul.mubr.bf16.gmra.mxu0 %v201
    %v237 = vpop.f32.mrf.mxu0
    %v238 = vadd.f32 %v152, %v237
    %v239 = vpop.f32.mrf.mxu0
    %v240 = vadd.f32 %v154, %v239
    %v241 = vpop.f32.mrf.mxu0
    %v242 = vadd.f32 %v156, %v241
    %v243 = vpop.f32.mrf.mxu0
    %v244 = vadd.f32 %v158, %v243
    %245 = vdwg.mxu0
    %v247 = vlaneseq
    %v248 = vshrl.u32 %v247, 7
    %v249 = vsub.s32 0, %v248
    %v250 = vrot.slane %v65, %v249
    %v251 = vlaneseq
    %v252 = vshrl.u32 %v251, 7
    %v253 = vsub.s32 1, %v252
    %v254 = vrot.slane %v65, %v253
    %v257 = vadd.f32 %v238, %v250
    %v258 = vadd.f32 %v240, %v254
    %v259 = vadd.f32 %v242, %v250
    %v260 = vadd.f32 %v244, %v254
    %261 = vst [vmem:[#allocation2] sm:$0xff] %v257
    %262 = vst [vmem:[#allocation2 + $0x8] sm:$0xff] %v258
    %263 = vst [vmem:[#allocation2 + $0x10] sm:$0xf] %v259
    %264 = vst [vmem:[#allocation2 + $0x18] sm:$0xf] %v260
    %s265 = scalar_lea.vmem %s0, 16
    %v266 = vld [vmem:[%s265] sm:$0xff]
    %v267 = vld [vmem:[%s265 + $0x8] sm:$0xf]
    %v268 = vpack.c.bf16 %v267, %v266
    %s269 = scalar_lea.vmem %s0, 32
    %v270 = vld [vmem:[%s269] sm:$0xff]
    %v271 = vld [vmem:[%s269 + $0x8] sm:$0xf]
    %v272 = vpack.c.bf16 %v271, %v270
    %v274 = vsel %vm113, %v272, 0
    %276 = vmatprep.subr.bf16.mxu0 0
    %277 = vmatpush1.bf16.msra.mxu0 0
    %278 = vmatprep.subr.bf16.mxu0 0
    %279 = vmatpush1.bf16.msra.mxu0 0
    %280 = vmatprep.subr.bf16.mxu0 0
    %281 = vmatpush1.bf16.msra.mxu0 0
    %282 = vmatprep.subr.bf16.mxu0 0
    %283 = vmatpush1.bf16.msra.mxu0 0
    %284 = vmatprep.subr.bf16.mxu0 %v104
    %285 = vmatpush1.bf16.msra.mxu0 %v103
    %286 = vmatprep.subr.bf16.mxu0 %v102
    %287 = vmatpush1.bf16.msra.mxu0 %v101
    %288 = vmatprep.subr.bf16.mxu0 %v100
    %289 = vmatpush1.bf16.msra.mxu0 %v99
    %290 = vmatprep.subr.bf16.mxu0 %v98
    %291 = vmatpush1.bf16.msra.mxu0 %v97
    %292 = vmatprep.subr.bf16.mxu0 0
    %293 = vmatpush2.bf16.msra.mxu0 0
    %294 = vmatprep.subr.bf16.mxu0 0
    %295 = vmatpush2.bf16.msra.mxu0 0
    %296 = vmatprep.subr.bf16.mxu0 0
    %297 = vmatpush2.bf16.msra.mxu0 0
    %298 = vmatprep.subr.bf16.mxu0 0
    %299 = vmatpush2.bf16.msra.mxu0 0
    %300 = vmatprep.subr.bf16.mxu0 0
    %301 = vmatpush2.bf16.msra.mxu0 0
    %302 = vmatprep.subr.bf16.mxu0 0
    %303 = vmatpush2.bf16.msra.mxu0 0
    %304 = vmatprep.subr.bf16.mxu0 0
    %305 = vmatpush2.bf16.msra.mxu0 0
    %306 = vmatprep.subr.bf16.mxu0 0
    %307 = vmatpush2.bf16.msra.mxu0 0
    %308 = vmatprep.mubr.bf16.mxu0 0
    %309 = vmatmul.mubr.bf16.gmra.mxu0 %v274
    %v310 = vpop.f32.mrf.mxu0
    %v311 = vadd.f32 0.0, %v310
    %v312 = vpop.f32.mrf.mxu0
    %v313 = vadd.f32 0.0, %v312
    %v314 = vpop.f32.mrf.mxu0
    %v315 = vadd.f32 0.0, %v314
    %v316 = vpop.f32.mrf.mxu0
    %v317 = vadd.f32 0.0, %v316
    %318 = vdwg.mxu0
    %v320 = vsel %vm113, %v268, 0
    %322 = vmatprep.subr.bf16.mxu0 0
    %323 = vmatpush1.bf16.msra.mxu0 0
    %324 = vmatprep.subr.bf16.mxu0 0
    %325 = vmatpush1.bf16.msra.mxu0 0
    %326 = vmatprep.subr.bf16.mxu0 0
    %327 = vmatpush1.bf16.msra.mxu0 0
    %328 = vmatprep.subr.bf16.mxu0 0
    %329 = vmatpush1.bf16.msra.mxu0 0
    %330 = vmatprep.subr.bf16.mxu0 %v191
    %331 = vmatpush1.bf16.msra.mxu0 %v190
    %332 = vmatprep.subr.bf16.mxu0 %v189
    %333 = vmatpush1.bf16.msra.mxu0 %v188
    %334 = vmatprep.subr.bf16.mxu0 %v187
    %335 = vmatpush1.bf16.msra.mxu0 %v186
    %336 = vmatprep.subr.bf16.mxu0 %v185
    %337 = vmatpush1.bf16.msra.mxu0 %v184
    %338 = vmatprep.subr.bf16.mxu0 0
    %339 = vmatpush2.bf16.msra.mxu0 0
    %340 = vmatprep.subr.bf16.mxu0 0
    %341 = vmatpush2.bf16.msra.mxu0 0
    %342 = vmatprep.subr.bf16.mxu0 0
    %343 = vmatpush2.bf16.msra.mxu0 0
    %344 = vmatprep.subr.bf16.mxu0 0
    %345 = vmatpush2.bf16.msra.mxu0 0
    %346 = vmatprep.subr.bf16.mxu0 0
    %347 = vmatpush2.bf16.msra.mxu0 0
    %348 = vmatprep.subr.bf16.mxu0 0
    %349 = vmatpush2.bf16.msra.mxu0 0
    %350 = vmatprep.subr.bf16.mxu0 0
    %351 = vmatpush2.bf16.msra.mxu0 0
    %352 = vmatprep.subr.bf16.mxu0 0
    %353 = vmatpush2.bf16.msra.mxu0 0
    %354 = vmatprep.mubr.bf16.mxu0 0
    %355 = vmatmul.mubr.bf16.gmra.mxu0 %v320
    %v356 = vpop.f32.mrf.mxu0
    %v357 = vadd.f32 %v311, %v356
    %v358 = vpop.f32.mrf.mxu0
    %v359 = vadd.f32 %v313, %v358
    %v360 = vpop.f32.mrf.mxu0
    %v361 = vadd.f32 %v315, %v360
    %v362 = vpop.f32.mrf.mxu0
    %v363 = vadd.f32 %v317, %v362
    %364 = vdwg.mxu0
    %v365 = vadd.f32 %v357, %v250
    %v366 = vadd.f32 %v359, %v254
    %v367 = vadd.f32 %v361, %v250
    %v368 = vadd.f32 %v363, %v254
    %s369 = scalar_lea.vmem [#allocation2], 32
    %370 = vst [vmem:[%s369] sm:$0xff] %v365
    %371 = vst [vmem:[%s369 + $0x8] sm:$0xff] %v366
    %372 = vst [vmem:[%s369 + $0x10] sm:$0xf] %v367
    %373 = vst [vmem:[%s369 + $0x18] sm:$0xf] %v368
    %v374 = vld [vmem:[%s269] sm:$0xff]
    %v375 = vld [vmem:[%s269 + $0x8] sm:$0xf]
    %v376 = vpack.c.bf16 %v375, %v374
    %v377 = vld [vmem:[%s265] sm:$0xff]
    %v378 = vld [vmem:[%s265 + $0x8] sm:$0xf]
    %v379 = vpack.c.bf16 %v378, %v377
    %v381 = vsel %vm113, %v379, 0
    %383 = vmatprep.subr.bf16.mxu0 0
    %384 = vmatpush1.bf16.msra.mxu0 0
    %385 = vmatprep.subr.bf16.mxu0 0
    %386 = vmatpush1.bf16.msra.mxu0 0
    %387 = vmatprep.subr.bf16.mxu0 0
    %388 = vmatpush1.bf16.msra.mxu0 0
    %389 = vmatprep.subr.bf16.mxu0 0
    %390 = vmatpush1.bf16.msra.mxu0 0
    %391 = vmatprep.subr.bf16.mxu0 %v104
    %392 = vmatpush1.bf16.msra.mxu0 %v103
    %393 = vmatprep.subr.bf16.mxu0 %v102
    %394 = vmatpush1.bf16.msra.mxu0 %v101
    %395 = vmatprep.subr.bf16.mxu0 %v100
    %396 = vmatpush1.bf16.msra.mxu0 %v99
    %397 = vmatprep.subr.bf16.mxu0 %v98
    %398 = vmatpush1.bf16.msra.mxu0 %v97
    %399 = vmatprep.subr.bf16.mxu0 0
    %400 = vmatpush2.bf16.msra.mxu0 0
    %401 = vmatprep.subr.bf16.mxu0 0
    %402 = vmatpush2.bf16.msra.mxu0 0
    %403 = vmatprep.subr.bf16.mxu0 0
    %404 = vmatpush2.bf16.msra.mxu0 0
    %405 = vmatprep.subr.bf16.mxu0 0
    %406 = vmatpush2.bf16.msra.mxu0 0
    %407 = vmatprep.subr.bf16.mxu0 0
    %408 = vmatpush2.bf16.msra.mxu0 0
    %409 = vmatprep.subr.bf16.mxu0 0
    %410 = vmatpush2.bf16.msra.mxu0 0
    %411 = vmatprep.subr.bf16.mxu0 0
    %412 = vmatpush2.bf16.msra.mxu0 0
    %413 = vmatprep.subr.bf16.mxu0 0
    %414 = vmatpush2.bf16.msra.mxu0 0
    %415 = vmatprep.mubr.bf16.mxu0 0
    %416 = vmatmul.mubr.bf16.gmra.mxu0 %v381
    %v417 = vpop.f32.mrf.mxu0
    %v418 = vadd.f32 0.0, %v417
    %v419 = vpop.f32.mrf.mxu0
    %v420 = vadd.f32 0.0, %v419
    %v421 = vpop.f32.mrf.mxu0
    %v422 = vadd.f32 0.0, %v421
    %v423 = vpop.f32.mrf.mxu0
    %v424 = vadd.f32 0.0, %v423
    %425 = vdwg.mxu0
    %v427 = vsel %vm113, %v376, 0
    %429 = vmatprep.subr.bf16.mxu0 0
    %430 = vmatpush1.bf16.msra.mxu0 0
    %431 = vmatprep.subr.bf16.mxu0 0
    %432 = vmatpush1.bf16.msra.mxu0 0
    %433 = vmatprep.subr.bf16.mxu0 0
    %434 = vmatpush1.bf16.msra.mxu0 0
    %435 = vmatprep.subr.bf16.mxu0 0
    %436 = vmatpush1.bf16.msra.mxu0 0
    %437 = vmatprep.subr.bf16.mxu0 %v191
    %438 = vmatpush1.bf16.msra.mxu0 %v190
    %439 = vmatprep.subr.bf16.mxu0 %v189
    %440 = vmatpush1.bf16.msra.mxu0 %v188
    %441 = vmatprep.subr.bf16.mxu0 %v187
    %442 = vmatpush1.bf16.msra.mxu0 %v186
    %443 = vmatprep.subr.bf16.mxu0 %v185
    %444 = vmatpush1.bf16.msra.mxu0 %v184
    %445 = vmatprep.subr.bf16.mxu0 0
    %446 = vmatpush2.bf16.msra.mxu0 0
    %447 = vmatprep.subr.bf16.mxu0 0
    %448 = vmatpush2.bf16.msra.mxu0 0
    %449 = vmatprep.subr.bf16.mxu0 0
    %450 = vmatpush2.bf16.msra.mxu0 0
    %451 = vmatprep.subr.bf16.mxu0 0
    %452 = vmatpush2.bf16.msra.mxu0 0
    %453 = vmatprep.subr.bf16.mxu0 0
    %454 = vmatpush2.bf16.msra.mxu0 0
    %455 = vmatprep.subr.bf16.mxu0 0
    %456 = vmatpush2.bf16.msra.mxu0 0
    %457 = vmatprep.subr.bf16.mxu0 0
    %458 = vmatpush2.bf16.msra.mxu0 0
    %459 = vmatprep.subr.bf16.mxu0 0
    %460 = vmatpush2.bf16.msra.mxu0 0
    %461 = vmatprep.mubr.bf16.mxu0 0
    %462 = vmatmul.mubr.bf16.gmra.mxu0 %v427
    %v463 = vpop.f32.mrf.mxu0
    %v464 = vadd.f32 %v418, %v463
    %v465 = vpop.f32.mrf.mxu0
    %v466 = vadd.f32 %v420, %v465
    %v467 = vpop.f32.mrf.mxu0
    %v468 = vadd.f32 %v422, %v467
    %v469 = vpop.f32.mrf.mxu0
    %v470 = vadd.f32 %v424, %v469
    %471 = vdwg.mxu0
    %v472 = vadd.f32 %v464, %v250
    %v473 = vadd.f32 %v466, %v254
    %v474 = vadd.f32 %v468, %v250
    %v475 = vadd.f32 %v470, %v254
    %s476 = scalar_lea.vmem [#allocation2], 64
    %477 = vst [vmem:[%s476] sm:$0xff] %v472
    %478 = vst [vmem:[%s476 + $0x8] sm:$0xff] %v473
    %479 = vst [vmem:[%s476 + $0x10] sm:$0xf] %v474
    %480 = vst [vmem:[%s476 + $0x18] sm:$0xf] %v475
    %v481 = vld [vmem:[%s69] sm:$0xff]
    %v482 = vld [vmem:[%s69 + $0x8] sm:$0xf]
    %v483 = vpack.c.bf16 %v482, %v481
    %v484 = vld [vmem:[%s0] sm:$0xff]
    %v485 = vld [vmem:[%s0 + $0x8] sm:$0xf]
    %v486 = vpack.c.bf16 %v485, %v484
    %v488 = vsel %vm113, %v486, 0
    %490 = vmatprep.subr.bf16.mxu0 0
    %491 = vmatpush1.bf16.msra.mxu0 0
    %492 = vmatprep.subr.bf16.mxu0 0
    %493 = vmatpush1.bf16.msra.mxu0 0
    %494 = vmatprep.subr.bf16.mxu0 0
    %495 = vmatpush1.bf16.msra.mxu0 0
    %496 = vmatprep.subr.bf16.mxu0 0
    %497 = vmatpush1.bf16.msra.mxu0 0
    %498 = vmatprep.subr.bf16.mxu0 %v104
    %499 = vmatpush1.bf16.msra.mxu0 %v103
    %500 = vmatprep.subr.bf16.mxu0 %v102
    %501 = vmatpush1.bf16.msra.mxu0 %v101
    %502 = vmatprep.subr.bf16.mxu0 %v100
    %503 = vmatpush1.bf16.msra.mxu0 %v99
    %504 = vmatprep.subr.bf16.mxu0 %v98
    %505 = vmatpush1.bf16.msra.mxu0 %v97
    %506 = vmatprep.subr.bf16.mxu0 0
    %507 = vmatpush2.bf16.msra.mxu0 0
    %508 = vmatprep.subr.bf16.mxu0 0
    %509 = vmatpush2.bf16.msra.mxu0 0
    %510 = vmatprep.subr.bf16.mxu0 0
    %511 = vmatpush2.bf16.msra.mxu0 0
    %512 = vmatprep.subr.bf16.mxu0 0
    %513 = vmatpush2.bf16.msra.mxu0 0
    %514 = vmatprep.subr.bf16.mxu0 0
    %515 = vmatpush2.bf16.msra.mxu0 0
    %516 = vmatprep.subr.bf16.mxu0 0
    %517 = vmatpush2.bf16.msra.mxu0 0
    %518 = vmatprep.subr.bf16.mxu0 0
    %519 = vmatpush2.bf16.msra.mxu0 0
    %520 = vmatprep.subr.bf16.mxu0 0
    %521 = vmatpush2.bf16.msra.mxu0 0
    %522 = vmatprep.mubr.bf16.mxu0 0
    %523 = vmatmul.mubr.bf16.gmra.mxu0 %v488
    %v524 = vpop.f32.mrf.mxu0
    %v525 = vadd.f32 0.0, %v524
    %v526 = vpop.f32.mrf.mxu0
    %v527 = vadd.f32 0.0, %v526
    %v528 = vpop.f32.mrf.mxu0
    %v529 = vadd.f32 0.0, %v528
    %v530 = vpop.f32.mrf.mxu0
    %v531 = vadd.f32 0.0, %v530
    %532 = vdwg.mxu0
    %v534 = vsel %vm113, %v483, 0
    %536 = vmatprep.subr.bf16.mxu0 0
    %537 = vmatpush1.bf16.msra.mxu0 0
    %538 = vmatprep.subr.bf16.mxu0 0
    %539 = vmatpush1.bf16.msra.mxu0 0
    %540 = vmatprep.subr.bf16.mxu0 0
    %541 = vmatpush1.bf16.msra.mxu0 0
    %542 = vmatprep.subr.bf16.mxu0 0
    %543 = vmatpush1.bf16.msra.mxu0 0
    %544 = vmatprep.subr.bf16.mxu0 %v191
    %545 = vmatpush1.bf16.msra.mxu0 %v190
    %546 = vmatprep.subr.bf16.mxu0 %v189
    %547 = vmatpush1.bf16.msra.mxu0 %v188
    %548 = vmatprep.subr.bf16.mxu0 %v187
    %549 = vmatpush1.bf16.msra.mxu0 %v186
    %550 = vmatprep.subr.bf16.mxu0 %v185
    %551 = vmatpush1.bf16.msra.mxu0 %v184
    %552 = vmatprep.subr.bf16.mxu0 0
    %553 = vmatpush2.bf16.msra.mxu0 0
    %554 = vmatprep.subr.bf16.mxu0 0
    %555 = vmatpush2.bf16.msra.mxu0 0
    %556 = vmatprep.subr.bf16.mxu0 0
    %557 = vmatpush2.bf16.msra.mxu0 0
    %558 = vmatprep.subr.bf16.mxu0 0
    %559 = vmatpush2.bf16.msra.mxu0 0
    %560 = vmatprep.subr.bf16.mxu0 0
    %561 = vmatpush2.bf16.msra.mxu0 0
    %562 = vmatprep.subr.bf16.mxu0 0
    %563 = vmatpush2.bf16.msra.mxu0 0
    %564 = vmatprep.subr.bf16.mxu0 0
    %565 = vmatpush2.bf16.msra.mxu0 0
    %566 = vmatprep.subr.bf16.mxu0 0
    %567 = vmatpush2.bf16.msra.mxu0 0
    %568 = vmatprep.mubr.bf16.mxu0 0
    %569 = vmatmul.mubr.bf16.gmra.mxu0 %v534
    %v570 = vpop.f32.mrf.mxu0
    %v571 = vadd.f32 %v525, %v570
    %v572 = vpop.f32.mrf.mxu0
    %v573 = vadd.f32 %v527, %v572
    %v574 = vpop.f32.mrf.mxu0
    %v575 = vadd.f32 %v529, %v574
    %v576 = vpop.f32.mrf.mxu0
    %v577 = vadd.f32 %v531, %v576
    %578 = vdwg.mxu0
    %v579 = vadd.f32 %v571, %v250
    %v580 = vadd.f32 %v573, %v254
    %v581 = vadd.f32 %v575, %v250
    %v582 = vadd.f32 %v577, %v254
    %s583 = scalar_lea.vmem [#allocation2], 96
    %584 = vst [vmem:[%s583] sm:$0xff] %v579
    %585 = vst [vmem:[%s583 + $0x8] sm:$0xff] %v580
    %586 = vst [vmem:[%s583 + $0x10] sm:$0xf] %v581
    %587 = vst [vmem:[%s583 + $0x18] sm:$0xf] %v582
    %v596 = vunpack.c.l.b16 %v57
    %v597 = vunpack.c.h.b16 %v57
    %v598 = vunpack.c.l.b16 %v58
    %v599 = vunpack.c.h.b16 %v58
    %v600 = vunpack.c.l.b16 %v59
    %v601 = vunpack.c.h.b16 %v59
    %v602 = vunpack.c.l.b16 %v60
    %v603 = vunpack.c.h.b16 %v60
    %v604 = vunpack.c.l.b16 %v61
    %v605 = vunpack.c.h.b16 %v61
    %v606 = vunpack.c.l.b16 %v62
    %v607 = vunpack.c.h.b16 %v62
    %v608 = vunpack.c.l.b16 %v63
    %v609 = vunpack.c.h.b16 %v63
    %v610 = vunpack.c.l.b16 %v64
    %v611 = vunpack.c.h.b16 %v64
    %v612 = vpack.c.b16 %v598, %v596
    %v613 = vpack.c.b16 %v599, %v597
    %v614 = vpack.c.b16 %v602, %v600
    %v615 = vpack.c.b16 %v603, %v601
    %v616 = vpack.c.b16 %v606, %v604
    %v617 = vpack.c.b16 %v607, %v605
    %v618 = vpack.c.b16 %v610, %v608
    %v619 = vpack.c.b16 %v611, %v609
    %v629 = vsel %vm113, 0, 0
    %631 = vmatprep.subr.bf16.mxu0 0
    %632 = vmatpush1.bf16.msra.mxu0 0
    %633 = vmatprep.subr.bf16.mxu0 0
    %634 = vmatpush1.bf16.msra.mxu0 0
    %635 = vmatprep.subr.bf16.mxu0 0
    %636 = vmatpush1.bf16.msra.mxu0 0
    %637 = vmatprep.subr.bf16.mxu0 0
    %638 = vmatpush1.bf16.msra.mxu0 0
    %639 = vmatprep.subr.bf16.mxu0 %v619
    %640 = vmatpush1.bf16.msra.mxu0 %v618
    %641 = vmatprep.subr.bf16.mxu0 %v617
    %642 = vmatpush1.bf16.msra.mxu0 %v616
    %643 = vmatprep.subr.bf16.mxu0 %v615
    %644 = vmatpush1.bf16.msra.mxu0 %v614
    %645 = vmatprep.subr.bf16.mxu0 %v613
    %646 = vmatpush1.bf16.msra.mxu0 %v612
    %647 = vmatprep.subr.bf16.mxu0 0
    %648 = vmatpush2.bf16.msra.mxu0 0
    %649 = vmatprep.subr.bf16.mxu0 0
    %650 = vmatpush2.bf16.msra.mxu0 0
    %651 = vmatprep.subr.bf16.mxu0 0
    %652 = vmatpush2.bf16.msra.mxu0 0
    %653 = vmatprep.subr.bf16.mxu0 0
    %654 = vmatpush2.bf16.msra.mxu0 0
    %655 = vmatprep.subr.bf16.mxu0 0
    %656 = vmatpush2.bf16.msra.mxu0 0
    %657 = vmatprep.subr.bf16.mxu0 0
    %658 = vmatpush2.bf16.msra.mxu0 0
    %659 = vmatprep.subr.bf16.mxu0 0
    %660 = vmatpush2.bf16.msra.mxu0 0
    %661 = vmatprep.subr.bf16.mxu0 0
    %662 = vmatpush2.bf16.msra.mxu0 0
    %663 = vmatprep.mubr.bf16.mxu0 0
    %664 = vmatmul.mubr.bf16.gmra.mxu0 %v629
    %v665 = vpop.f32.mrf.mxu0
    %v666 = vadd.f32 0.0, %v665
    %v667 = vpop.f32.mrf.mxu0
    %v668 = vadd.f32 0.0, %v667
    %v669 = vpop.f32.mrf.mxu0
    %v670 = vadd.f32 0.0, %v669
    %v671 = vpop.f32.mrf.mxu0
    %v672 = vadd.f32 0.0, %v671
    %673 = vdwg.mxu0
    %v674 = vld [vmem:[#allocation2] sm:$0xff]
    %v675 = vld [vmem:[#allocation2 + $0x8] sm:$0xff]
    %v676 = vld [vmem:[#allocation2 + $0x10] sm:$0xf]
    %v677 = vld [vmem:[#allocation2 + $0x18] sm:$0xf]
    %v678 = vadd.f32 %v674, %v666
    %v679 = vadd.f32 %v675, %v668
    %v680 = vadd.f32 %v676, %v670
    %v681 = vadd.f32 %v677, %v672
    %v682 = vxor.u32 %v678, 2147483648
    %v683 = vxor.u32 %v679, 2147483648
    %v684 = vxor.u32 %v680, 2147483648
    %v685 = vxor.u32 %v681, 2147483648
    %v686 = vmul.f32 %v682, 1.442695
    %v687 = vpow.pop %v686
    %v688 = vmul.f32 %v683, 1.442695
    %v689 = vpow.pop %v688
    %v690 = vmul.f32 %v684, 1.442695
    %v691 = vpow.pop %v690
    %v692 = vmul.f32 %v685, 1.442695
    %v693 = vpow.pop %v692
    %v694 = vadd.f32 %v687, 1.0
    %v695 = vadd.f32 %v689, 1.0
    %v696 = vadd.f32 %v691, 1.0
    %v697 = vadd.f32 %v693, 1.0
    %v698 = vrcp.pop %v694
    %v699 = vmul.f32 1.0, %v698
    %v700 = vrcp.pop %v695
    %v701 = vmul.f32 1.0, %v700
    %v702 = vrcp.pop %v696
    %v703 = vmul.f32 1.0, %v702
    %v704 = vrcp.pop %v697
    %v705 = vmul.f32 1.0, %v704
    %v706 = vtanh.pop %v679
    %v707 = vtanh.pop %v681
    %v708 = vmul.f32 %v699, 0.0
    %v709 = vmul.f32 %v703, 0.0
    %712 = vrot.lane.b32.xlu0 %v706, 64
    %v713 = vpop.permute.xlu0 %712
    %714 = vrot.lane.b32.xlu0 %v707, 64
    %v715 = vpop.permute.xlu0 %714
    %v718 = vmul.f32 %v699, %v713
    %v719 = vmul.f32 %v703, %v715
    %722 = vrot.lane.b32.xlu0 %v718, 64
    %v723 = vpop.permute.xlu0 %722
    %724 = vrot.lane.b32.xlu0 %v719, 64
    %v725 = vpop.permute.xlu0 %724
    %v728 = vadd.f32 %v708, %v723
    %v729 = vadd.f32 %v709, %v725
    %v730 = vtanh.pop %v728
    %v731 = vtanh.pop %v729
    %734 = vrot.lane.b32.xlu0 %v730, 64
    %v735 = vpop.permute.xlu0 %734
    %736 = vrot.lane.b32.xlu0 %v731, 64
    %v737 = vpop.permute.xlu0 %736
    %v740 = vmul.f32 %v701, %v735
    %v741 = vmul.f32 %v705, %v737
    %vm742 = vcmask 261120
    %v743 = vsel %vm742, %v740, 0.0
    %744 = vadd.xlane.f32.xlu0 %v743
    %v745 = vpop.xlane.xlu0 %744
    %vm746 = vcmask 257024
    %v747 = vsel %vm746, %v741, 0.0
    %748 = vadd.xlane.f32.xlu0 %v747
    %v749 = vpop.xlane.xlu0 %748
    %752 = vrot.lane.b32.xlu0 %v740, 96
    %v753 = vpop.permute.xlu0 %752
    %754 = vrot.lane.b32.xlu0 %v741, 96
    %v755 = vpop.permute.xlu0 %754
    %v758 = vsel %vm742, %v753, 0.0
    %759 = vadd.xlane.f32.xlu0 %v758
    %v760 = vpop.xlane.xlu0 %759
    %v761 = vsel %vm746, %v755, 0.0
    %762 = vadd.xlane.f32.xlu0 %v761
    %v763 = vpop.xlane.xlu0 %762
    %v764 = vpack.c.bf16 %v741, %v740
    %v766 = vsel %vm113, %v764, 0
    %768 = vmatprep.subr.bf16.mxu0 0
    %769 = vmatpush1.bf16.msra.mxu0 0
    %770 = vmatprep.subr.bf16.mxu0 0
    %771 = vmatpush1.bf16.msra.mxu0 0
    %772 = vmatprep.subr.bf16.mxu0 0
    %773 = vmatpush1.bf16.msra.mxu0 0
    %774 = vmatprep.subr.bf16.mxu0 0
    %775 = vmatpush1.bf16.msra.mxu0 0
    %776 = vmatprep.subr.bf16.mxu0 %v619
    %777 = vmatpush1.bf16.msra.mxu0 %v618
    %778 = vmatprep.subr.bf16.mxu0 %v617
    %779 = vmatpush1.bf16.msra.mxu0 %v616
    %780 = vmatprep.subr.bf16.mxu0 %v615
    %781 = vmatpush1.bf16.msra.mxu0 %v614
    %782 = vmatprep.subr.bf16.mxu0 %v613
    %783 = vmatpush1.bf16.msra.mxu0 %v612
    %784 = vmatprep.subr.bf16.mxu0 0
    %785 = vmatpush2.bf16.msra.mxu0 0
    %786 = vmatprep.subr.bf16.mxu0 0
    %787 = vmatpush2.bf16.msra.mxu0 0
    %788 = vmatprep.subr.bf16.mxu0 0
    %789 = vmatpush2.bf16.msra.mxu0 0
    %790 = vmatprep.subr.bf16.mxu0 0
    %791 = vmatpush2.bf16.msra.mxu0 0
    %792 = vmatprep.subr.bf16.mxu0 0
    %793 = vmatpush2.bf16.msra.mxu0 0
    %794 = vmatprep.subr.bf16.mxu0 0
    %795 = vmatpush2.bf16.msra.mxu0 0
    %796 = vmatprep.subr.bf16.mxu0 0
    %797 = vmatpush2.bf16.msra.mxu0 0
    %798 = vmatprep.subr.bf16.mxu0 0
    %799 = vmatpush2.bf16.msra.mxu0 0
    %800 = vmatprep.mubr.bf16.mxu0 0
    %801 = vmatmul.mubr.bf16.gmra.mxu0 %v766
    %v802 = vpop.f32.mrf.mxu0
    %v803 = vadd.f32 0.0, %v802
    %v804 = vpop.f32.mrf.mxu0
    %v805 = vadd.f32 0.0, %v804
    %v806 = vpop.f32.mrf.mxu0
    %v807 = vadd.f32 0.0, %v806
    %v808 = vpop.f32.mrf.mxu0
    %v809 = vadd.f32 0.0, %v808
    %810 = vdwg.mxu0
    %v811 = vld [vmem:[%s369] sm:$0xff]
    %v812 = vld [vmem:[%s369 + $0x8] sm:$0xff]
    %v813 = vld [vmem:[%s369 + $0x10] sm:$0xf]
    %v814 = vld [vmem:[%s369 + $0x18] sm:$0xf]
    %v815 = vadd.f32 %v811, %v803
    %v816 = vadd.f32 %v812, %v805
    %v817 = vadd.f32 %v813, %v807
    %v818 = vadd.f32 %v814, %v809
    %v819 = vxor.u32 %v815, 2147483648
    %v820 = vxor.u32 %v816, 2147483648
    %v821 = vxor.u32 %v817, 2147483648
    %v822 = vxor.u32 %v818, 2147483648
    %v823 = vmul.f32 %v819, 1.442695
    %v824 = vpow.pop %v823
    %v825 = vmul.f32 %v820, 1.442695
    %v826 = vpow.pop %v825
    %v827 = vmul.f32 %v821, 1.442695
    %v828 = vpow.pop %v827
    %v829 = vmul.f32 %v822, 1.442695
    %v830 = vpow.pop %v829
    %v831 = vadd.f32 %v824, 1.0
    %v832 = vadd.f32 %v826, 1.0
    %v833 = vadd.f32 %v828, 1.0
    %v834 = vadd.f32 %v830, 1.0
    %v835 = vrcp.pop %v831
    %v836 = vmul.f32 1.0, %v835
    %v837 = vrcp.pop %v832
    %v838 = vmul.f32 1.0, %v837
    %v839 = vrcp.pop %v833
    %v840 = vmul.f32 1.0, %v839
    %v841 = vrcp.pop %v834
    %v842 = vmul.f32 1.0, %v841
    %v843 = vtanh.pop %v816
    %v844 = vtanh.pop %v818
    %v845 = vmul.f32 %v836, %v728
    %v846 = vmul.f32 %v840, %v729
    %849 = vrot.lane.b32.xlu0 %v843, 64
    %v850 = vpop.permute.xlu0 %849
    %851 = vrot.lane.b32.xlu0 %v844, 64
    %v852 = vpop.permute.xlu0 %851
    %v855 = vmul.f32 %v836, %v850
    %v856 = vmul.f32 %v840, %v852
    %859 = vrot.lane.b32.xlu0 %v855, 64
    %v860 = vpop.permute.xlu0 %859
    %861 = vrot.lane.b32.xlu0 %v856, 64
    %v862 = vpop.permute.xlu0 %861
    %v865 = vadd.f32 %v845, %v860
    %v866 = vadd.f32 %v846, %v862
    %v867 = vtanh.pop %v865
    %v868 = vtanh.pop %v866
    %871 = vrot.lane.b32.xlu0 %v867, 64
    %v872 = vpop.permute.xlu0 %871
    %873 = vrot.lane.b32.xlu0 %v868, 64
    %v874 = vpop.permute.xlu0 %873
    %v877 = vmul.f32 %v838, %v872
    %v878 = vmul.f32 %v842, %v874
    %v879 = vsel %vm742, %v877, 0.0
    %880 = vadd.xlane.f32.xlu0 %v879
    %v881 = vpop.xlane.xlu0 %880
    %v882 = vsel %vm746, %v878, 0.0
    %883 = vadd.xlane.f32.xlu0 %v882
    %v884 = vpop.xlane.xlu0 %883
    %887 = vrot.lane.b32.xlu0 %v877, 96
    %v888 = vpop.permute.xlu0 %887
    %889 = vrot.lane.b32.xlu0 %v878, 96
    %v890 = vpop.permute.xlu0 %889
    %v893 = vsel %vm742, %v888, 0.0
    %894 = vadd.xlane.f32.xlu0 %v893
    %v895 = vpop.xlane.xlu0 %894
    %v896 = vsel %vm746, %v890, 0.0
    %897 = vadd.xlane.f32.xlu0 %v896
    %v898 = vpop.xlane.xlu0 %897
    %v899 = vpack.c.bf16 %v878, %v877
    %v901 = vsel %vm113, %v899, 0
    %903 = vmatprep.subr.bf16.mxu0 0
    %904 = vmatpush1.bf16.msra.mxu0 0
    %905 = vmatprep.subr.bf16.mxu0 0
    %906 = vmatpush1.bf16.msra.mxu0 0
    %907 = vmatprep.subr.bf16.mxu0 0
    %908 = vmatpush1.bf16.msra.mxu0 0
    %909 = vmatprep.subr.bf16.mxu0 0
    %910 = vmatpush1.bf16.msra.mxu0 0
    %911 = vmatprep.subr.bf16.mxu0 %v619
    %912 = vmatpush1.bf16.msra.mxu0 %v618
    %913 = vmatprep.subr.bf16.mxu0 %v617
    %914 = vmatpush1.bf16.msra.mxu0 %v616
    %915 = vmatprep.subr.bf16.mxu0 %v615
    %916 = vmatpush1.bf16.msra.mxu0 %v614
    %917 = vmatprep.subr.bf16.mxu0 %v613
    %918 = vmatpush1.bf16.msra.mxu0 %v612
    %919 = vmatprep.subr.bf16.mxu0 0
    %920 = vmatpush2.bf16.msra.mxu0 0
    %921 = vmatprep.subr.bf16.mxu0 0
    %922 = vmatpush2.bf16.msra.mxu0 0
    %923 = vmatprep.subr.bf16.mxu0 0
    %924 = vmatpush2.bf16.msra.mxu0 0
    %925 = vmatprep.subr.bf16.mxu0 0
    %926 = vmatpush2.bf16.msra.mxu0 0
    %927 = vmatprep.subr.bf16.mxu0 0
    %928 = vmatpush2.bf16.msra.mxu0 0
    %929 = vmatprep.subr.bf16.mxu0 0
    %930 = vmatpush2.bf16.msra.mxu0 0
    %931 = vmatprep.subr.bf16.mxu0 0
    %932 = vmatpush2.bf16.msra.mxu0 0
    %933 = vmatprep.subr.bf16.mxu0 0
    %934 = vmatpush2.bf16.msra.mxu0 0
    %935 = vmatprep.mubr.bf16.mxu0 0
    %936 = vmatmul.mubr.bf16.gmra.mxu0 %v901
    %v937 = vpop.f32.mrf.mxu0
    %v938 = vadd.f32 0.0, %v937
    %v939 = vpop.f32.mrf.mxu0
    %v940 = vadd.f32 0.0, %v939
    %v941 = vpop.f32.mrf.mxu0
    %v942 = vadd.f32 0.0, %v941
    %v943 = vpop.f32.mrf.mxu0
    %v944 = vadd.f32 0.0, %v943
    %945 = vdwg.mxu0
    %v946 = vld [vmem:[%s476] sm:$0xff]
    %v947 = vld [vmem:[%s476 + $0x8] sm:$0xff]
    %v948 = vld [vmem:[%s476 + $0x10] sm:$0xf]
    %v949 = vld [vmem:[%s476 + $0x18] sm:$0xf]
    %v950 = vadd.f32 %v946, %v938
    %v951 = vadd.f32 %v947, %v940
    %v952 = vadd.f32 %v948, %v942
    %v953 = vadd.f32 %v949, %v944
    %v954 = vxor.u32 %v950, 2147483648
    %v955 = vxor.u32 %v951, 2147483648
    %v956 = vxor.u32 %v952, 2147483648
    %v957 = vxor.u32 %v953, 2147483648
    %v958 = vmul.f32 %v954, 1.442695
    %v959 = vpow.pop %v958
    %v960 = vmul.f32 %v955, 1.442695
    %v961 = vpow.pop %v960
    %v962 = vmul.f32 %v956, 1.442695
    %v963 = vpow.pop %v962
    %v964 = vmul.f32 %v957, 1.442695
    %v965 = vpow.pop %v964
    %v966 = vadd.f32 %v959, 1.0
    %v967 = vadd.f32 %v961, 1.0
    %v968 = vadd.f32 %v963, 1.0
    %v969 = vadd.f32 %v965, 1.0
    %v970 = vrcp.pop %v966
    %v971 = vmul.f32 1.0, %v970
    %v972 = vrcp.pop %v967
    %v973 = vmul.f32 1.0, %v972
    %v974 = vrcp.pop %v968
    %v975 = vmul.f32 1.0, %v974
    %v976 = vrcp.pop %v969
    %v977 = vmul.f32 1.0, %v976
    %v978 = vtanh.pop %v951
    %v979 = vtanh.pop %v953
    %v980 = vmul.f32 %v971, %v865
    %v981 = vmul.f32 %v975, %v866
    %984 = vrot.lane.b32.xlu0 %v978, 64
    %v985 = vpop.permute.xlu0 %984
    %986 = vrot.lane.b32.xlu0 %v979, 64
    %v987 = vpop.permute.xlu0 %986
    %v990 = vmul.f32 %v971, %v985
    %v991 = vmul.f32 %v975, %v987
    %994 = vrot.lane.b32.xlu0 %v990, 64
    %v995 = vpop.permute.xlu0 %994
    %996 = vrot.lane.b32.xlu0 %v991, 64
    %v997 = vpop.permute.xlu0 %996
    %v1000 = vadd.f32 %v980, %v995
    %v1001 = vadd.f32 %v981, %v997
    %v1002 = vtanh.pop %v1000
    %v1003 = vtanh.pop %v1001
    %1006 = vrot.lane.b32.xlu0 %v1002, 64
    %v1007 = vpop.permute.xlu0 %1006
    %1008 = vrot.lane.b32.xlu0 %v1003, 64
    %v1009 = vpop.permute.xlu0 %1008
    %v1012 = vmul.f32 %v973, %v1007
    %v1013 = vmul.f32 %v977, %v1009
    %v1014 = vsel %vm742, %v1012, 0.0
    %1015 = vadd.xlane.f32.xlu0 %v1014
    %v1016 = vpop.xlane.xlu0 %1015
    %v1017 = vsel %vm746, %v1013, 0.0
    %1018 = vadd.xlane.f32.xlu0 %v1017
    %v1019 = vpop.xlane.xlu0 %1018
    %1022 = vrot.lane.b32.xlu0 %v1012, 96
    %v1023 = vpop.permute.xlu0 %1022
    %1024 = vrot.lane.b32.xlu0 %v1013, 96
    %v1025 = vpop.permute.xlu0 %1024
    %v1028 = vsel %vm742, %v1023, 0.0
    %1029 = vadd.xlane.f32.xlu0 %v1028
    %v1030 = vpop.xlane.xlu0 %1029
    %v1031 = vsel %vm746, %v1025, 0.0
    %1032 = vadd.xlane.f32.xlu0 %v1031
    %v1033 = vpop.xlane.xlu0 %1032
    %v1034 = vpack.c.bf16 %v1013, %v1012
    %v1036 = vsel %vm113, %v1034, 0
    %1038 = vmatprep.subr.bf16.mxu0 0
    %1039 = vmatpush1.bf16.msra.mxu0 0
    %1040 = vmatprep.subr.bf16.mxu0 0
    %1041 = vmatpush1.bf16.msra.mxu0 0
    %1042 = vmatprep.subr.bf16.mxu0 0
    %1043 = vmatpush1.bf16.msra.mxu0 0
    %1044 = vmatprep.subr.bf16.mxu0 0
    %1045 = vmatpush1.bf16.msra.mxu0 0
    %1046 = vmatprep.subr.bf16.mxu0 %v619
    %1047 = vmatpush1.bf16.msra.mxu0 %v618
    %1048 = vmatprep.subr.bf16.mxu0 %v617
    %1049 = vmatpush1.bf16.msra.mxu0 %v616
    %1050 = vmatprep.subr.bf16.mxu0 %v615
    %1051 = vmatpush1.bf16.msra.mxu0 %v614
    %1052 = vmatprep.subr.bf16.mxu0 %v613
    %1053 = vmatpush1.bf16.msra.mxu0 %v612
    %1054 = vmatprep.subr.bf16.mxu0 0
    %1055 = vmatpush2.bf16.msra.mxu0 0
    %1056 = vmatprep.subr.bf16.mxu0 0
    %1057 = vmatpush2.bf16.msra.mxu0 0
    %1058 = vmatprep.subr.bf16.mxu0 0
    %1059 = vmatpush2.bf16.msra.mxu0 0
    %1060 = vmatprep.subr.bf16.mxu0 0
    %1061 = vmatpush2.bf16.msra.mxu0 0
    %1062 = vmatprep.subr.bf16.mxu0 0
    %1063 = vmatpush2.bf16.msra.mxu0 0
    %1064 = vmatprep.subr.bf16.mxu0 0
    %1065 = vmatpush2.bf16.msra.mxu0 0
    %1066 = vmatprep.subr.bf16.mxu0 0
    %1067 = vmatpush2.bf16.msra.mxu0 0
    %1068 = vmatprep.subr.bf16.mxu0 0
    %1069 = vmatpush2.bf16.msra.mxu0 0
    %1070 = vmatprep.mubr.bf16.mxu0 0
    %1071 = vmatmul.mubr.bf16.gmra.mxu0 %v1036
    %v1072 = vpop.f32.mrf.mxu0
    %v1073 = vadd.f32 0.0, %v1072
    %v1074 = vpop.f32.mrf.mxu0
    %v1075 = vadd.f32 0.0, %v1074
    %v1076 = vpop.f32.mrf.mxu0
    %v1077 = vadd.f32 0.0, %v1076
    %v1078 = vpop.f32.mrf.mxu0
    %v1079 = vadd.f32 0.0, %v1078
    %1080 = vdwg.mxu0
    %v1081 = vld [vmem:[%s583] sm:$0xff]
    %v1082 = vld [vmem:[%s583 + $0x8] sm:$0xff]
    %v1083 = vld [vmem:[%s583 + $0x10] sm:$0xf]
    %v1084 = vld [vmem:[%s583 + $0x18] sm:$0xf]
    %v1085 = vadd.f32 %v1081, %v1073
    %v1086 = vadd.f32 %v1082, %v1075
    %v1087 = vadd.f32 %v1083, %v1077
    %v1088 = vadd.f32 %v1084, %v1079
    %v1089 = vxor.u32 %v1085, 2147483648
    %v1090 = vxor.u32 %v1086, 2147483648
    %v1091 = vxor.u32 %v1087, 2147483648
    %v1092 = vxor.u32 %v1088, 2147483648
    %v1093 = vmul.f32 %v1089, 1.442695
    %v1094 = vpow.pop %v1093
    %v1095 = vmul.f32 %v1090, 1.442695
    %v1096 = vpow.pop %v1095
    %v1097 = vmul.f32 %v1091, 1.442695
    %v1098 = vpow.pop %v1097
    %v1099 = vmul.f32 %v1092, 1.442695
    %v1100 = vpow.pop %v1099
    %v1101 = vadd.f32 %v1094, 1.0
    %v1102 = vadd.f32 %v1096, 1.0
    %v1103 = vadd.f32 %v1098, 1.0
    %v1104 = vadd.f32 %v1100, 1.0
    %v1105 = vrcp.pop %v1101
    %v1106 = vmul.f32 1.0, %v1105
    %v1107 = vrcp.pop %v1102
    %v1108 = vmul.f32 1.0, %v1107
    %v1109 = vrcp.pop %v1103
    %v1110 = vmul.f32 1.0, %v1109
    %v1111 = vrcp.pop %v1104
    %v1112 = vmul.f32 1.0, %v1111
    %v1113 = vtanh.pop %v1086
    %v1114 = vtanh.pop %v1088
    %v1115 = vmul.f32 %v1106, %v1000
    %v1116 = vmul.f32 %v1110, %v1001
    %1119 = vrot.lane.b32.xlu0 %v1113, 64
    %v1120 = vpop.permute.xlu0 %1119
    %1121 = vrot.lane.b32.xlu0 %v1114, 64
    %v1122 = vpop.permute.xlu0 %1121
    %v1125 = vmul.f32 %v1106, %v1120
    %v1126 = vmul.f32 %v1110, %v1122
    %1129 = vrot.lane.b32.xlu0 %v1125, 64
    %v1130 = vpop.permute.xlu0 %1129
    %1131 = vrot.lane.b32.xlu0 %v1126, 64
    %v1132 = vpop.permute.xlu0 %1131
    %v1135 = vadd.f32 %v1115, %v1130
    %v1136 = vadd.f32 %v1116, %v1132
    %v1137 = vtanh.pop %v1135
    %v1138 = vtanh.pop %v1136
    %1141 = vrot.lane.b32.xlu0 %v1137, 64
    %v1142 = vpop.permute.xlu0 %1141
    %1143 = vrot.lane.b32.xlu0 %v1138, 64
    %v1144 = vpop.permute.xlu0 %1143
    %v1147 = vmul.f32 %v1108, %v1142
    %v1148 = vmul.f32 %v1112, %v1144
    %v1149 = vsel %vm742, %v1147, 0.0
    %1150 = vadd.xlane.f32.xlu0 %v1149
    %v1151 = vpop.xlane.xlu0 %1150
    %v1152 = vsel %vm746, %v1148, 0.0
    %1153 = vadd.xlane.f32.xlu0 %v1152
    %v1154 = vpop.xlane.xlu0 %1153
    %1157 = vrot.lane.b32.xlu0 %v1147, 96
    %v1158 = vpop.permute.xlu0 %1157
    %1159 = vrot.lane.b32.xlu0 %v1148, 96
    %v1160 = vpop.permute.xlu0 %1159
    %v1163 = vsel %vm742, %v1158, 0.0
    %1164 = vadd.xlane.f32.xlu0 %v1163
    %v1165 = vpop.xlane.xlu0 %1164
    %v1166 = vsel %vm746, %v1160, 0.0
    %1167 = vadd.xlane.f32.xlu0 %v1166
    %v1168 = vpop.xlane.xlu0 %1167
    %v1169 = vld [vmem:[%s5] sm:$0xff]
    %v1170 = vld [vmem:[%s5 + $0x8] sm:$0xf]
    %v1171 = vadd.f32 %v745, %v1165
    %v1172 = vadd.f32 %v749, %v1168
    %v1173 = vmul.f32 %v1171, 0.015625
    %v1174 = vmul.f32 %v1172, 0.015625
    %v1175 = vmul.f32 %v1173, %v1169
    %v1176 = vmul.f32 %v1174, %v1170
    %vm1177 = vcmask 15360
    %v1178 = vsel %vm1177, %v1175, 0.0
    %vm1179 = vcmask 11264
    %v1180 = vsel %vm1179, %v1176, 0.0
    %v1181 = vadd.f32 %v1178, %v1180
    %v1182 = vrot.slane %v1181, 4
    %v1183 = vadd.f32 %v1181, %v1182
    %v1184 = vrot.slane %v1183, 2
    %v1185 = vadd.f32 %v1183, %v1184
    %v1186 = vrot.slane %v1185, 1
    %v1187 = vadd.f32 %v1185, %v1186
    %v1188 = vadd.f32 %v881, %v1030
    %v1189 = vadd.f32 %v884, %v1033
    %v1190 = vmul.f32 %v1188, 0.015625
    %v1191 = vmul.f32 %v1189, 0.015625
    %v1192 = vmul.f32 %v1190, %v1169
    %v1193 = vmul.f32 %v1191, %v1170
    %v1194 = vsel %vm1177, %v1192, 0.0
    %v1195 = vsel %vm1179, %v1193, 0.0
    %v1196 = vadd.f32 %v1194, %v1195
    %v1197 = vrot.slane %v1196, 4
    %v1198 = vadd.f32 %v1196, %v1197
    %v1199 = vrot.slane %v1198, 2
    %v1200 = vadd.f32 %v1198, %v1199
    %v1201 = vrot.slane %v1200, 1
    %v1202 = vadd.f32 %v1200, %v1201
    %v1203 = vadd.f32 %v1016, %v895
    %v1204 = vadd.f32 %v1019, %v898
    %v1205 = vmul.f32 %v1203, 0.015625
    %v1206 = vmul.f32 %v1204, 0.015625
    %v1207 = vmul.f32 %v1205, %v1169
    %v1208 = vmul.f32 %v1206, %v1170
    %v1209 = vsel %vm1177, %v1207, 0.0
    %v1210 = vsel %vm1179, %v1208, 0.0
    %v1211 = vadd.f32 %v1209, %v1210
    %v1212 = vrot.slane %v1211, 4
    %v1213 = vadd.f32 %v1211, %v1212
    %v1214 = vrot.slane %v1213, 2
    %v1215 = vadd.f32 %v1213, %v1214
    %v1216 = vrot.slane %v1215, 1
    %v1217 = vadd.f32 %v1215, %v1216
    %v1218 = vadd.f32 %v1151, %v760
    %v1219 = vadd.f32 %v1154, %v763
    %v1220 = vmul.f32 %v1218, 0.015625
    %v1221 = vmul.f32 %v1219, 0.015625
    %v1222 = vmul.f32 %v1220, %v1169
    %v1223 = vmul.f32 %v1221, %v1170
    %v1224 = vsel %vm1177, %v1222, 0.0
    %v1225 = vsel %vm1179, %v1223, 0.0
    %v1226 = vadd.f32 %v1224, %v1225
    %v1227 = vrot.slane %v1226, 4
    %v1228 = vadd.f32 %v1226, %v1227
    %v1229 = vrot.slane %v1228, 2
    %v1230 = vadd.f32 %v1228, %v1229
    %v1231 = vrot.slane %v1230, 1
    %v1232 = vadd.f32 %v1230, %v1231
    %vm1233 = vcmask 1040384
    %v1234 = vsel %vm1233, %v1187, %v1202
    %vm1235 = vcmask 1041408
    %v1236 = vsel %vm1235, %v1234, %v1217
    %vm1237 = vcmask 1042432
    %v1238 = vsel %vm1237, %v1236, %v1232
    %v1239 = vld [vmem:[%s6] sm:$0x1]
    %v1241 = vlaneseq
    %v1242 = vshrl.u32 %v1241, 7
    %v1243 = vsub.s32 0, %v1242
    %v1244 = vrot.slane %v1239, %v1243
    %v1246 = vadd.f32 %v1238, %v1244
    %1247 = vst.msk [vmem:[%s7] sm:$0xf] %vm1179, %v1246
    // Predicated region
    $region34: #{brnn_forward.1} parent=1 // pred_check
      _
    $region35: #{brnn_forward.1} parent=1 // pred_check_branch
      %1249 = sbr.rel (0) target = $region37
    $region36: #{brnn_forward.1} parent=1 // pred_region
      _
    $region37: #{brnn_forward.1} parent=1 // pred_fallthru
      _
    // Predicated region
    $region38: #{brnn_forward.1} parent=1 // pred_check
      _
    $region39: #{brnn_forward.1} parent=1 // pred_check_branch
      %1251 = sbr.rel (0) target = $region41
    $region40: #{brnn_forward.1} parent=1 // pred_region
      _
    $region41: #{brnn_forward.1} parent=1 // pred_fallthru
      _
    %1252 = vsyncpa [#allocation4], 1

</llo_original>
